<compile_context>
chip_gen: v7x
topology: tpu7x:2x2x1
jax: 0.10.0
libtpu: 0.0.40
codegen_flags: <defaults>
</compile_context>

<pallas_src>
import functools

import jax
import jax.numpy as jnp
from jax import lax
from jax.experimental import pallas as pl
from jax.experimental.pallas import tpu as pltpu


def _round_up(x, m):
    return (x + m - 1) // m * m


# ----------------------------------------------------------------------------
# Kernel
# ----------------------------------------------------------------------------

def spatial_attn_kernel(l_ref, g_ref, w_ref, c_ref, go_ref, *, normalize_attn, hw):
    """One block of BN batch rows of SpatialAttn.

    l_ref : (BN, Cp, HWp) local features, native dtype, C on sublanes, HW on lanes
    g_ref : (BN, Cp, 1)   global feature (f32), like torch's (N, C, 1, 1)
    w_ref : (Cp, 1)       1x1-conv weight (f32, zero-padded channels)
    c_ref : (BN, HWp)     raw pre-softmax scores (f32), lane/sublane dense
    go_ref: (BN, Cp)      attended feature vectors (f32), lane/sublane dense
    """
    bn, cp, hwp = l_ref.shape
    wv = w_ref[...]                                    # (Cp, 1) f32
    gv = g_ref[...]                                    # (BN, Cp, 1) f32

    # Single upcast if the producer streams a narrow dtype; no-op for f32 input.
    ltf = l_ref[...].astype(jnp.float32)               # (BN, Cp, HWp)

    # 1x1 conv over channels, split as s0 + const (softmax is shift invariant,
    # so the per-row scalar `const` only matters for the c output):
    #   s0[b, hw] = sum_c l[b, c, hw] * w[c]   (VPU mul + sublane reduce)
    #   const[b]  = sum_c g[b, c]    * w[c]    (tiny)
    s0 = jnp.sum(ltf * wv[None, :, :], axis=1)          # (BN, HWp) f32
    const = jnp.sum(gv * wv[None, :, :], axis=1)         # (BN, 1)   f32

    c_ref[...] = s0 + const                              # pad lanes sliced off by wrapper

    # Mask padded spatial lanes out of the softmax / pooling.
    if hwp > hw:
        lane = lax.broadcasted_iota(jnp.int32, (bn, hwp), 1)
        valid = lane < hw
    else:
        valid = None

    if normalize_attn:
        s = s0 if valid is None else jnp.where(valid, s0, -1e30)
        m = jnp.max(s, axis=-1, keepdims=True)           # (BN, 1)
        p = jnp.exp(s - m)                                # padded lanes -> ~0
        a = p * pl.reciprocal(jnp.sum(p, axis=-1, keepdims=True), approx=True)
    else:
        a = jax.nn.sigmoid(s0 + const)
        if valid is not None:
            a = jnp.where(valid, a, 0.0)

    # g_out[b, c] = sum_hw a[b, hw] * l[b, c, hw]   (VPU mul + lane reduce, f32)
    go = jnp.sum(ltf * a[:, None, :], axis=2)             # (BN, Cp) f32
    if not normalize_attn:
        go = go * (1.0 / hw)                              # adaptive_avg_pool2d((1,1))
    go_ref[...] = go


# ----------------------------------------------------------------------------
# Wrapper
# ----------------------------------------------------------------------------

def spatial_attn(l, g, w, *, normalize_attn=True, block_batch=None):
    """l: (N,C,H,W), g: (N,C,1,1), w: (1,C,1,1) -> (c (N,1,H,W), g_out (N,C))."""
    N, C, H, W = l.shape
    HW = H * W
    Cp = _round_up(C, 8)
    HWp = _round_up(HW, 128)

    # Keep l in its native dtype (bf16 producers stay bf16 -> half the HBM bytes).
    l3 = l.reshape(N, C, HW)
    g3 = g.reshape(N, C, 1).astype(jnp.float32)
    w2 = jnp.reshape(w, (C, 1)).astype(jnp.float32)

    # Batch tile BN: multiple of 8 (sublane-dense stores), (BN, Cp, HWp) block
    # capped at ~2 MiB so double-buffering + f32 temporaries fit every
    # generation's default scoped VMEM (incl. v5e 16 MiB / v7x 32 MiB), BN<=32,
    # and kept small enough to leave >=2 grid steps for v7x's two TensorCores.
    bytes_per_row = Cp * HWp * l3.dtype.itemsize
    if block_batch is None:
        bn = min(32, max(8, ((2 * 1024 * 1024) // max(bytes_per_row, 1)) // 8 * 8))
        bn = min(bn, _round_up(N, 8))          # don't over-pad tiny batches
        if N > 8:
            bn = min(bn, max(8, _round_up(-(-N // 2), 8)))   # grid >= 2 when possible
    else:
        bn = block_batch
    Np = _round_up(N, bn)

    # Pad to aligned extents (zeros: padded channels contribute 0 to the score
    # and 0 rows to g_out; padded lanes/rows are masked / sliced off).
    l3 = jnp.pad(l3, ((0, Np - N), (0, Cp - C), (0, HWp - HW)))
    g3 = jnp.pad(g3, ((0, Np - N), (0, Cp - C), (0, 0)))
    w2 = jnp.pad(w2, ((0, Cp - C), (0, 0)))

    kernel = functools.partial(spatial_attn_kernel,
                               normalize_attn=normalize_attn, hw=HW)

    c_out, g_out = pl.pallas_call(
        kernel,
        out_shape=(
            jax.ShapeDtypeStruct((Np, HWp), jnp.float32),
            jax.ShapeDtypeStruct((Np, Cp), jnp.float32),
        ),
        grid=(Np // bn,),
        in_specs=[
            pl.BlockSpec((bn, Cp, HWp), lambda n: (n, 0, 0)),
            pl.BlockSpec((bn, Cp, 1), lambda n: (n, 0, 0)),
            pl.BlockSpec((Cp, 1), lambda n: (0, 0)),
        ],
        out_specs=(
            pl.BlockSpec((bn, HWp), lambda n: (n, 0)),
            pl.BlockSpec((bn, Cp), lambda n: (n, 0)),
        ),
        compiler_params=pltpu.CompilerParams(
            dimension_semantics=("parallel",),
        ),
    )(l3, g3, w2)

    c = c_out[:N, :HW].reshape(N, 1, H, W)
    gout = g_out[:N, :C]
    return c, gout


# ----------------------------------------------------------------------------
# Pure-JAX reference (mirrors the PyTorch forward)
# ----------------------------------------------------------------------------

def spatial_attn_reference(l, g, w, *, normalize_attn=True):
    N, C, H, W = l.shape
    c = jnp.sum((l + g) * w.reshape(1, C, 1, 1), axis=1, keepdims=True)   # (N,1,H,W)
    if normalize_attn:
        a = jax.nn.softmax(c.reshape(N, 1, -1), axis=2).reshape(N, 1, H, W)
        gout = jnp.sum((a * l).reshape(N, C, -1), axis=2)
    else:
        a = jax.nn.sigmoid(c)
        gout = jnp.mean((a * l).reshape(N, C, -1), axis=2)
    return c, gout


# ----------------------------------------------------------------------------
# Main
# ----------------------------------------------------------------------------

if __name__ == "__main__":
    key = jax.random.PRNGKey(0)
    k_l, k_g, k_w, k_l2, k_g2, k_w2 = jax.random.split(key, 6)

    # Case 1: lane/sublane-aligned shapes; N=16 -> BN=8, 2 grid steps.
    N, C, H, W = 16, 64, 16, 16
    l = jax.random.normal(k_l, (N, C, H, W), jnp.float32)
    g = jax.random.normal(k_g, (N, C, 1, 1), jnp.float32)
    w = jax.random.normal(k_w, (1, C, 1, 1), jnp.float32) * (2.0 / C) ** 0.5

    fwd = jax.jit(functools.partial(spatial_attn, normalize_attn=True))
    c, g_out = fwd(l, g, w)
    jax.block_until_ready((c, g_out))
    assert c.shape == (N, 1, H, W) and g_out.shape == (N, C)
    assert bool(jnp.all(jnp.isfinite(c))) and bool(jnp.all(jnp.isfinite(g_out)))

    c_ref, g_ref = spatial_attn_reference(l, g, w, normalize_attn=True)
    assert bool(jnp.allclose(c, c_ref, atol=1e-4, rtol=1e-4))
    assert bool(jnp.allclose(g_out, g_ref, atol=5e-3, rtol=5e-3))

    # Case 1b: normalize_attn=False branch (sigmoid + adaptive average pool).
    fwd_na = jax.jit(functools.partial(spatial_attn, normalize_attn=False))
    c2, g_out2 = fwd_na(l, g, w)
    jax.block_until_ready((c2, g_out2))
    c2_ref, g2_ref = spatial_attn_reference(l, g, w, normalize_attn=False)
    assert bool(jnp.allclose(c2, c2_ref, atol=1e-4, rtol=1e-4))
    assert bool(jnp.allclose(g_out2, g2_ref, atol=5e-3, rtol=5e-3))

    # Case 2: ragged channels/spatial (C=20, 7x7) -> exercises pad + lane masking.
    N2, C2, H2, W2 = 4, 20, 7, 7
    l2 = jax.random.normal(k_l2, (N2, C2, H2, W2), jnp.float32)
    g2 = jax.random.normal(k_g2, (N2, C2, 1, 1), jnp.float32)
    w2 = jax.random.normal(k_w2, (1, C2, 1, 1), jnp.float32) * (2.0 / C2) ** 0.5
    c3, g_out3 = fwd(l2, g2, w2)
    jax.block_until_ready((c3, g_out3))
    c3_ref, g3_ref = spatial_attn_reference(l2, g2, w2, normalize_attn=True)
    assert bool(jnp.allclose(c3, c3_ref, atol=1e-4, rtol=1e-4))
    assert bool(jnp.allclose(g_out3, g3_ref, atol=5e-3, rtol=5e-3))

    print("KERNEL_OK")
</pallas_src>

<mosaic_0001>
module attributes {stable_mosaic.version = 11 : i64} {
  func.func @spatial_attn_kernel(%arg0: i32, %arg1: memref<8x64x256xf32, #tpu.memory_space<vmem>>, %arg2: memref<8x64x1xf32, #tpu.memory_space<vmem>>, %arg3: memref<64x1xf32, #tpu.memory_space<vmem>>, %arg4: memref<8x256xf32, #tpu.memory_space<vmem>>, %arg5: memref<8x64xf32, #tpu.memory_space<vmem>>) attributes {dimension_semantics = [#tpu.dimension_semantics<parallel>], iteration_bounds = array<i64: 2>, scalar_prefetch = 0 : i64, scratch_operands = 0 : i64, tpu.core_type = #tpu.core_type<tc>, window_params = [{transform_indices = @transform_0, window_bounds = array<i64: 8, 64, 256>}, {transform_indices = @transform_1, window_bounds = array<i64: 8, 64, 1>}, {pipeline_mode = #tpu.pipeline_mode<synchronous>, transform_indices = @transform_2, window_bounds = array<i64: 64, 1>}, {transform_indices = @transform_3, window_bounds = array<i64: 8, 256>}, {transform_indices = @transform_4, window_bounds = array<i64: 8, 64>}]} {
    %c0 = arith.constant 0 : index
    %c0_0 = arith.constant 0 : index
    %0 = vector.load %arg3[%c0, %c0_0] : memref<64x1xf32, #tpu.memory_space<vmem>>, vector<64x1xf32>
    %c0_1 = arith.constant 0 : index
    %c0_2 = arith.constant 0 : index
    %c0_3 = arith.constant 0 : index
    %1 = vector.load %arg2[%c0_1, %c0_2, %c0_3] : memref<8x64x1xf32, #tpu.memory_space<vmem>>, vector<8x64x1xf32>
    %c0_4 = arith.constant 0 : index
    %c0_5 = arith.constant 0 : index
    %c0_6 = arith.constant 0 : index
    %2 = vector.load %arg1[%c0_4, %c0_5, %c0_6] : memref<8x64x256xf32, #tpu.memory_space<vmem>>, vector<8x64x256xf32>
    %3 = vector.shape_cast %0 : vector<64x1xf32> to vector<1x64x1xf32>
    %4 = vector.broadcast %3 : vector<1x64x1xf32> to vector<8x64x256xf32>
    %5 = arith.mulf %2, %4 : vector<8x64x256xf32>
    %cst = arith.constant dense<0.000000e+00> : vector<8x256xf32>
    %6 = vector.multi_reduction <add>, %5, %cst [1] : vector<8x64x256xf32> to vector<8x256xf32>
    %7 = vector.shape_cast %0 : vector<64x1xf32> to vector<1x64x1xf32>
    %8 = vector.broadcast %7 : vector<1x64x1xf32> to vector<8x64x1xf32>
    %9 = arith.mulf %1, %8 : vector<8x64x1xf32>
    %cst_7 = arith.constant dense<0.000000e+00> : vector<8x1xf32>
    %10 = vector.multi_reduction <add>, %9, %cst_7 [1] : vector<8x64x1xf32> to vector<8x1xf32>
    %11 = vector.broadcast %10 : vector<8x1xf32> to vector<8x256xf32>
    %12 = arith.addf %6, %11 : vector<8x256xf32>
    %c0_8 = arith.constant 0 : index
    %c0_9 = arith.constant 0 : index
    %13 = vector.load %arg4[%c0_8, %c0_9] : memref<8x256xf32, #tpu.memory_space<vmem>>, vector<8x256xf32>
    tpu.vector_store %arg4[%c0_8, %c0_9], %12 {strides = array<i32>} : memref<8x256xf32, #tpu.memory_space<vmem>>, vector<8x256xf32>,
    %cst_10 = arith.constant dense<0xFF800000> : vector<8xf32>
    %14 = vector.multi_reduction <maximumf>, %6, %cst_10 [1] : vector<8x256xf32> to vector<8xf32>
    %15 = vector.shape_cast %14 : vector<8xf32> to vector<8x1xf32>
    %16 = vector.broadcast %15 : vector<8x1xf32> to vector<8x256xf32>
    %17 = arith.subf %6, %16 : vector<8x256xf32>
    %18 = math.exp %17 : vector<8x256xf32>
    %cst_11 = arith.constant dense<0.000000e+00> : vector<8xf32>
    %19 = vector.multi_reduction <add>, %18, %cst_11 [1] : vector<8x256xf32> to vector<8xf32>
    %20 = vector.shape_cast %19 : vector<8xf32> to vector<8x1xf32>
    %21 = tpu.reciprocal %20 {approx = true} : vector<8x1xf32> -> vector<8x1xf32>
    %22 = vector.broadcast %21 : vector<8x1xf32> to vector<8x256xf32>
    %23 = arith.mulf %18, %22 : vector<8x256xf32>
    %24 = vector.shape_cast %23 : vector<8x256xf32> to vector<8x1x256xf32>
    %25 = vector.broadcast %24 : vector<8x1x256xf32> to vector<8x64x256xf32>
    %26 = arith.mulf %2, %25 : vector<8x64x256xf32>
    %cst_12 = arith.constant dense<0.000000e+00> : vector<8x64xf32>
    %27 = vector.multi_reduction <add>, %26, %cst_12 [2] : vector<8x64x256xf32> to vector<8x64xf32>
    %c0_13 = arith.constant 0 : index
    %c0_14 = arith.constant 0 : index
    %28 = vector.load %arg5[%c0_13, %c0_14] : memref<8x64xf32, #tpu.memory_space<vmem>>, vector<8x64xf32>
    tpu.vector_store %arg5[%c0_13, %c0_14], %27 {strides = array<i32>} : memref<8x64xf32, #tpu.memory_space<vmem>>, vector<8x64xf32>,
    return
  }
  func.func @transform_0(%arg0: i32) -> (i32, i32, i32) {
    %c0_i32 = arith.constant 0 : i32
    %c0_i32_0 = arith.constant 0 : i32
    %c0_i32_1 = arith.constant 0 : i32
    return %arg0, %c0_i32, %c0_i32_0 : i32, i32, i32
  }
  func.func @transform_1(%arg0: i32) -> (i32, i32, i32) {
    %c0_i32 = arith.constant 0 : i32
    %c0_i32_0 = arith.constant 0 : i32
    %c0_i32_1 = arith.constant 0 : i32
    return %arg0, %c0_i32, %c0_i32_0 : i32, i32, i32
  }
  func.func @transform_2(%arg0: i32) -> (i32, i32) {
    %c0_i32 = arith.constant 0 : i32
    %c0_i32_0 = arith.constant 0 : i32
    %c0_i32_1 = arith.constant 0 : i32
    return %c0_i32, %c0_i32_0 : i32, i32
  }
  func.func @transform_3(%arg0: i32) -> (i32, i32) {
    %c0_i32 = arith.constant 0 : i32
    %c0_i32_0 = arith.constant 0 : i32
    return %arg0, %c0_i32 : i32, i32
  }
  func.func @transform_4(%arg0: i32) -> (i32, i32) {
    %c0_i32 = arith.constant 0 : i32
    %c0_i32_0 = arith.constant 0 : i32
    return %arg0, %c0_i32 : i32, i32
  }
}

</mosaic_0001>

<llo_original>
// kernel: spatial_attn.1
$region0: #{spatial_attn.1}
  #allocation0 [shape = 'u32[]', space=smem, size = 0x4, offset = 0x4, fixed_abs, tag = 'smem constant byte address 0x4 - core index']
  #allocation1 [shape = 'u32[144,128]{1,0:T(1,128)}', space=vmem, size = 0x12000, scoped, tag = 'internal scratch']
  %s0 = inlined_call_operand.vmem [shape: f32[16,64,256], index: 0, kind: input, shape index: {}]
  %s1 = inlined_call_operand.vmem [shape: f32[16,64,1], index: 1, kind: input, shape index: {}]
  %s2 = inlined_call_operand.vmem [shape: f32[64,1], index: 2, kind: input, shape index: {}]
  %s3 = inlined_call_operand.vmem [shape: f32[16,256], index: 3, kind: output, shape index: {0}]
  %s4 = inlined_call_operand.hbm [shape: f32[16,64], index: 4, kind: output, shape index: {1}]
  %5 = xla_tuple %s3, %s4
  %s6 = sld [smem:[#allocation0]]
  $region53: #{spatial_attn.1} parent=0
    _
  %s8 = ssub.s32 1, %s6
  %s9 = scalar_select 0, %s8, %s6
  $region1: #{spatial_attn.1} parent=0
    #allocation2 [shape = 'u8[8192]{0}', space=vmem, size = 0x2000, scoped, tag = 'output window, operand 1']
    #allocation3 [shape = 's32[2]{0}', space=sflag, size = 0x8, scoped, tag = 'scoped memory for spatial_attn.1']
    %10 = vsyncpa [#allocation3], 0
    %s11 = scalar_lea.sflag [#allocation3], 1
    %12 = vsyncpa %s11, 0
    loop: start=0, step=1, limit=4
    $region2: #{spatial_attn.1} parent=1 // loop_pre_header
      _
    $region3: #{spatial_attn.1} parent=1 // loop_header
      %s14 = sphi 0, %s18
      %p15 = scmp.ge.s32.totalorder %s14, 4
      %s24 = sphi 0, %s26
      %s27 = sphi 0, %s24
      %s28 = sphi 0, %s27
      %s44 = sphi 0, %s28
      %s50 = sphi 0, %s52
      %s53 = sphi 0, %s50
      %s54 = sphi 0, %s53
      %s70 = sphi 0, %s54
      %s74 = sphi 0, %s74
      %s76 = sphi 0, %s74
      %s77 = sphi 0, %s76
      %s91 = sphi 0, %s77
      %s97 = sphi 0, %s99
      %s100 = sphi 0, %s97
      %s101 = sphi 0, %s100
      %s117 = sphi 0, %s101
      %s123 = sphi 0, %s125
      %s126 = sphi 0, %s123
      %s127 = sphi 0, %s126
      %s143 = sphi 0, %s127
    $region4: #{spatial_attn.1} parent=1 // loop_header_branch
      %17 = sbr.rel (%p15) target = $region8
    $region5: #{spatial_attn.1} parent=1 // loop_body
      %s19 = ssub.s32 %s14, 1
      %s20 = ssub.s32 %s14, 2
      %s21 = sadd.s32 %s14, 1
      %s22 = ssub.s32 %s14, %s21
      %p23 = scmp.eq.s32.totalorder %s22, 0
      %s25 = sadd.s32 %s24, 1
      %s26 = scalar_select %p23, %s24, %s25
      %p29 = pneg %p23
      %p30 = scmp.eq.s32.totalorder %s14, 1
      %p31 = por %p29, %p30
      %p32 = scmp.ne.s32.totalorder %s24, %s27
      %p33 = scmp.eq.s32.totalorder %s14, 0
      %p34 = por %p32, %p33
      %p35 = scmp.ne.s32.totalorder %s24, %s27
      %p36 = scmp.eq.s32.totalorder %s19, 1
      %p37 = por %p35, %p36
      %p38 = scmp.ne.s32.totalorder %s27, %s28
      %p39 = scmp.eq.s32.totalorder %s19, 0
      %p40 = por %p38, %p39
      %p41 = scmp.ne.s32.totalorder %s27, %s28
      %p42 = scmp.eq.s32.totalorder %s20, 1
      %p43 = por %p41, %p42
      %p45 = scmp.ne.s32.totalorder %s28, %s44
      %p46 = scmp.eq.s32.totalorder %s20, 0
      %p47 = por %p45, %p46
      %s48 = ssub.s32 %s14, %s21
      %p49 = scmp.eq.s32.totalorder %s48, 0
      %s51 = sadd.s32 %s50, 1
      %s52 = scalar_select %p49, %s50, %s51
      %p55 = pneg %p49
      %p56 = scmp.eq.s32.totalorder %s14, 1
      %p57 = por %p55, %p56
      %p58 = scmp.ne.s32.totalorder %s50, %s53
      %p59 = scmp.eq.s32.totalorder %s14, 0
      %p60 = por %p58, %p59
      %p61 = scmp.ne.s32.totalorder %s50, %s53
      %p62 = scmp.eq.s32.totalorder %s19, 1
      %p63 = por %p61, %p62
      %p64 = scmp.ne.s32.totalorder %s53, %s54
      %p65 = scmp.eq.s32.totalorder %s19, 0
      %p66 = por %p64, %p65
      %p67 = scmp.ne.s32.totalorder %s53, %s54
      %p68 = scmp.eq.s32.totalorder %s20, 1
      %p69 = por %p67, %p68
      %p71 = scmp.ne.s32.totalorder %s54, %s70
      %p72 = scmp.eq.s32.totalorder %s20, 0
      %p73 = por %p71, %p72
      %s75 = sadd.s32 %s74, 1
      %p78 = scmp.eq.s32.totalorder %s14, 1
      %p79 = scmp.ne.s32.totalorder %s74, %s76
      %p80 = scmp.eq.s32.totalorder %s14, 0
      %p81 = por %p79, %p80
      %p82 = scmp.ne.s32.totalorder %s74, %s76
      %p83 = scmp.eq.s32.totalorder %s19, 1
      %p84 = por %p82, %p83
      %p85 = scmp.ne.s32.totalorder %s76, %s77
      %p86 = scmp.eq.s32.totalorder %s19, 0
      %p87 = por %p85, %p86
      %p88 = scmp.ne.s32.totalorder %s76, %s77
      %p89 = scmp.eq.s32.totalorder %s20, 1
      %p90 = por %p88, %p89
      %p92 = scmp.ne.s32.totalorder %s77, %s91
      %p93 = scmp.eq.s32.totalorder %s20, 0
      %p94 = por %p92, %p93
      %s95 = ssub.s32 %s14, %s21
      %p96 = scmp.eq.s32.totalorder %s95, 0
      %s98 = sadd.s32 %s97, 1
      %s99 = scalar_select %p96, %s97, %s98
      %p102 = pneg %p96
      %p103 = scmp.eq.s32.totalorder %s14, 1
      %p104 = por %p102, %p103
      %p105 = scmp.ne.s32.totalorder %s97, %s100
      %p106 = scmp.eq.s32.totalorder %s14, 0
      %p107 = por %p105, %p106
      %p108 = scmp.ne.s32.totalorder %s97, %s100
      %p109 = scmp.eq.s32.totalorder %s19, 1
      %p110 = por %p108, %p109
      %p111 = scmp.ne.s32.totalorder %s100, %s101
      %p112 = scmp.eq.s32.totalorder %s19, 0
      %p113 = por %p111, %p112
      %p114 = scmp.ne.s32.totalorder %s100, %s101
      %p115 = scmp.eq.s32.totalorder %s20, 1
      %p116 = por %p114, %p115
      %p118 = scmp.ne.s32.totalorder %s101, %s117
      %p119 = scmp.eq.s32.totalorder %s20, 0
      %p120 = por %p118, %p119
      %s121 = ssub.s32 %s14, %s21
      %p122 = scmp.eq.s32.totalorder %s121, 0
      %s124 = sadd.s32 %s123, 1
      %s125 = scalar_select %p122, %s123, %s124
      %p128 = pneg %p122
      %p129 = scmp.eq.s32.totalorder %s14, 1
      %p130 = por %p128, %p129
      %p131 = scmp.ne.s32.totalorder %s123, %s126
      %p132 = scmp.eq.s32.totalorder %s14, 0
      %p133 = por %p131, %p132
      %p134 = scmp.ne.s32.totalorder %s123, %s126
      %p135 = scmp.eq.s32.totalorder %s19, 1
      %p136 = por %p134, %p135
      %p137 = scmp.ne.s32.totalorder %s126, %s127
      %p138 = scmp.eq.s32.totalorder %s19, 0
      %p139 = por %p137, %p138
      %p140 = scmp.ne.s32.totalorder %s126, %s127
      %p141 = scmp.eq.s32.totalorder %s20, 1
      %p142 = por %p140, %p141
      %p144 = scmp.ne.s32.totalorder %s127, %s143
      %p145 = scmp.eq.s32.totalorder %s20, 0
      %p146 = por %p144, %p145
      %p147 = scmp.le.s32.totalorder 1, %s14
      %p148 = scmp.lt.s32.totalorder %s14, 3
      %p149 = pnand %p147, %p148
      %p150 = pneg %p149
      // Predicated region
      $region9: #{spatial_attn.1} parent=5 // pred_check
        _
      $region10: #{spatial_attn.1} parent=5 // pred_check_branch
        %152 = sbr.rel (%p149) target = $region12
      $region11: #{spatial_attn.1} parent=5 // pred_region
        %s153 = ssub.s32 %s14, 1
        // Predicated region
        $region13: #{spatial_attn.1} parent=11 // pred_check
          %p154 = pneg %p87
        $region14: #{spatial_attn.1} parent=11 // pred_check_branch
          %156 = sbr.rel (%p154) target = $region16
        $region15: #{spatial_attn.1} parent=11 // pred_region
          _
        $region16: #{spatial_attn.1} parent=11 // pred_fallthru
          _
      $region12: #{spatial_attn.1} parent=5 // pred_fallthru
        _
      %p157 = scmp.lt.s32.totalorder %s14, 2
      // Predicated region
      $region17: #{spatial_attn.1} parent=5 // pred_check
        %p158 = pneg %p157
      $region18: #{spatial_attn.1} parent=5 // pred_check_branch
        %160 = sbr.rel (%p158) target = $region20
      $region19: #{spatial_attn.1} parent=5 // pred_region
        // Predicated region
        $region21: #{spatial_attn.1} parent=19 // pred_check
          %p161 = pneg %p34
        $region22: #{spatial_attn.1} parent=19 // pred_check_branch
          %163 = sbr.rel (%p161) target = $region24
        $region23: #{spatial_attn.1} parent=19 // pred_region
          %s164 = smul.u32 8, %s14
          %p165 = scmp.lt.s32.totalorder %s164, 15
          %s166 = scalar_select %p165, %s164, 15
          %s167 = smul.addr %s166, 16
          %s168 = smul.addr %s167, 8
          %s169 = scalar_lea.vmem %s0, %s168
          %s170 = smul.u32 8, %s14
        $region24: #{spatial_attn.1} parent=19 // pred_fallthru
          _
        // Predicated region
        $region25: #{spatial_attn.1} parent=19 // pred_check
          %p171 = pneg %p60
        $region26: #{spatial_attn.1} parent=19 // pred_check_branch
          %173 = sbr.rel (%p171) target = $region28
        $region27: #{spatial_attn.1} parent=19 // pred_region
          %s174 = smul.u32 8, %s14
          %p175 = scmp.lt.s32.totalorder %s174, 15
          %s176 = scalar_select %p175, %s174, 15
          %s177 = smul.addr %s176, 8
          %s178 = smul.addr %s177, 8
          %s179 = scalar_lea.vmem %s1, %s178
          %s180 = smul.u32 8, %s14
        $region28: #{spatial_attn.1} parent=19 // pred_fallthru
          _
      $region20: #{spatial_attn.1} parent=5 // pred_fallthru
        _
      %p181 = scmp.le.s32.totalorder 1, %s14
      %p182 = scmp.lt.s32.totalorder %s14, 3
      %p183 = pnand %p181, %p182
      %p184 = pneg %p183
      // Predicated region
      $region29: #{spatial_attn.1} parent=5 // pred_check
        _
      $region30: #{spatial_attn.1} parent=5 // pred_check_branch
        %186 = sbr.rel (%p183) target = $region32
      $region31: #{spatial_attn.1} parent=5 // pred_region
        %s187 = ssub.s32 %s14, 1
        %s188 = smul.u32 8, %s19
        %p189 = scmp.lt.s32.totalorder %s188, 15
        %s190 = scalar_select %p189, %s188, 15
        %s191 = smul.addr %s190, 16
        %s192 = smul.addr %s191, 8
        %s193 = scalar_lea.vmem %s0, %s192
        %p194 = pneg %p40
        %p195 = pneg %p37
        %s196 = smul.u32 8, %s19
        %p197 = scmp.lt.s32.totalorder %s196, 15
        %s198 = scalar_select %p197, %s196, 15
        %s199 = smul.addr %s198, 8
        %s200 = smul.addr %s199, 8
        %s201 = scalar_lea.vmem %s1, %s200
        %p202 = pneg %p66
        %p203 = pneg %p63
        %p204 = pneg %p87
        %p205 = pneg %p84
        %p206 = pneg %p113
        %p207 = pneg %p110
        %p208 = scmp.lt.s32.totalorder %s19, 1
        %s209 = scalar_select %p208, %s19, 1
        %s210 = smul.addr %s209, 2
        %s211 = smul.addr %s210, 8
        %s212 = scalar_lea.vmem %s3, %s211
        %p213 = pneg %p139
        %p214 = pneg %p136
        %s215 = sand.u32 %s126, 1
        %s216 = scalar_lea.sflag [#allocation3], %s215
        %s217 = sand.u32 %s126, 1
        %s218 = smul.addr %s217, 8
        %s219 = scalar_lea.vmem [#allocation2], %s218
        %s220 = smul.u32 8, %s19
        %p221 = scmp.lt.s32.totalorder %s220, 15
        %s222 = scalar_select %p221, %s220, 15
        %s223 = smul.addr %s222, 16
        %s224 = smul.addr %s223, 8
        %s225 = scalar_lea.vmem %s0, %s224
        %s226 = smul.u32 8, %s19
        %s227 = smul.u32 8, %s19
        %p228 = scmp.lt.s32.totalorder %s227, 15
        %s229 = scalar_select %p228, %s227, 15
        %s230 = smul.addr %s229, 8
        %s231 = smul.addr %s230, 8
        %s232 = scalar_lea.vmem %s1, %s231
        %s233 = smul.u32 8, %s19
        %p234 = scmp.lt.s32.totalorder %s19, 1
        %s235 = scalar_select %p234, %s19, 1
        %s236 = smul.addr %s235, 2
        %s237 = smul.addr %s236, 8
        %s238 = scalar_lea.vmem %s3, %s237
        %v239 = vld [vmem:[%s2] sm:$0xff]
        %v240 = vld [vmem:[%s2 + $0x8] sm:$0xff]
        %v241 = vld [vmem:[%s2 + $0x10] sm:$0xff]
        %v242 = vld [vmem:[%s2 + $0x18] sm:$0xff]
        %v243 = vld [vmem:[%s2 + $0x20] sm:$0xff]
        %v244 = vld [vmem:[%s2 + $0x28] sm:$0xff]
        %v245 = vld [vmem:[%s2 + $0x30] sm:$0xff]
        %v246 = vld [vmem:[%s2 + $0x38] sm:$0xff]
        %v247 = vld [vmem:[%s232] sm:$0xff]
        %v248 = vld [vmem:[%s232 + $0x8] sm:$0xff]
        %v249 = vld [vmem:[%s232 + $0x10] sm:$0xff]
        %v250 = vld [vmem:[%s232 + $0x18] sm:$0xff]
        %v251 = vld [vmem:[%s232 + $0x20] sm:$0xff]
        %v252 = vld [vmem:[%s232 + $0x28] sm:$0xff]
        %v253 = vld [vmem:[%s232 + $0x30] sm:$0xff]
        %v254 = vld [vmem:[%s232 + $0x38] sm:$0xff]
        %v255 = vld [vmem:[%s232 + $0x40] sm:$0xff]
        %v256 = vld [vmem:[%s232 + $0x48] sm:$0xff]
        %v257 = vld [vmem:[%s232 + $0x50] sm:$0xff]
        %v258 = vld [vmem:[%s232 + $0x58] sm:$0xff]
        %v259 = vld [vmem:[%s232 + $0x60] sm:$0xff]
        %v260 = vld [vmem:[%s232 + $0x68] sm:$0xff]
        %v261 = vld [vmem:[%s232 + $0x70] sm:$0xff]
        %v262 = vld [vmem:[%s232 + $0x78] sm:$0xff]
        %v263 = vld [vmem:[%s232 + $0x80] sm:$0xff]
        %v264 = vld [vmem:[%s232 + $0x88] sm:$0xff]
        %v265 = vld [vmem:[%s232 + $0x90] sm:$0xff]
        %v266 = vld [vmem:[%s232 + $0x98] sm:$0xff]
        %v267 = vld [vmem:[%s232 + $0xa0] sm:$0xff]
        %v268 = vld [vmem:[%s232 + $0xa8] sm:$0xff]
        %v269 = vld [vmem:[%s232 + $0xb0] sm:$0xff]
        %v270 = vld [vmem:[%s232 + $0xb8] sm:$0xff]
        %v271 = vld [vmem:[%s232 + $0xc0] sm:$0xff]
        %v272 = vld [vmem:[%s232 + $0xc8] sm:$0xff]
        %v273 = vld [vmem:[%s232 + $0xd0] sm:$0xff]
        %v274 = vld [vmem:[%s232 + $0xd8] sm:$0xff]
        %v275 = vld [vmem:[%s232 + $0xe0] sm:$0xff]
        %v276 = vld [vmem:[%s232 + $0xe8] sm:$0xff]
        %v277 = vld [vmem:[%s232 + $0xf0] sm:$0xff]
        %v278 = vld [vmem:[%s232 + $0xf8] sm:$0xff]
        %v279 = vld [vmem:[%s232 + $0x100] sm:$0xff]
        %v280 = vld [vmem:[%s232 + $0x108] sm:$0xff]
        %v281 = vld [vmem:[%s232 + $0x110] sm:$0xff]
        %v282 = vld [vmem:[%s232 + $0x118] sm:$0xff]
        %v283 = vld [vmem:[%s232 + $0x120] sm:$0xff]
        %v284 = vld [vmem:[%s232 + $0x128] sm:$0xff]
        %v285 = vld [vmem:[%s232 + $0x130] sm:$0xff]
        %v286 = vld [vmem:[%s232 + $0x138] sm:$0xff]
        %v287 = vld [vmem:[%s232 + $0x140] sm:$0xff]
        %v288 = vld [vmem:[%s232 + $0x148] sm:$0xff]
        %v289 = vld [vmem:[%s232 + $0x150] sm:$0xff]
        %v290 = vld [vmem:[%s232 + $0x158] sm:$0xff]
        %v291 = vld [vmem:[%s232 + $0x160] sm:$0xff]
        %v292 = vld [vmem:[%s232 + $0x168] sm:$0xff]
        %v293 = vld [vmem:[%s232 + $0x170] sm:$0xff]
        %v294 = vld [vmem:[%s232 + $0x178] sm:$0xff]
        %v295 = vld [vmem:[%s232 + $0x180] sm:$0xff]
        %v296 = vld [vmem:[%s232 + $0x188] sm:$0xff]
        %v297 = vld [vmem:[%s232 + $0x190] sm:$0xff]
        %v298 = vld [vmem:[%s232 + $0x198] sm:$0xff]
        %v299 = vld [vmem:[%s232 + $0x1a0] sm:$0xff]
        %v300 = vld [vmem:[%s232 + $0x1a8] sm:$0xff]
        %v301 = vld [vmem:[%s232 + $0x1b0] sm:$0xff]
        %v302 = vld [vmem:[%s232 + $0x1b8] sm:$0xff]
        %v303 = vld [vmem:[%s232 + $0x1c0] sm:$0xff]
        %v304 = vld [vmem:[%s232 + $0x1c8] sm:$0xff]
        %v305 = vld [vmem:[%s232 + $0x1d0] sm:$0xff]
        %v306 = vld [vmem:[%s232 + $0x1d8] sm:$0xff]
        %v307 = vld [vmem:[%s232 + $0x1e0] sm:$0xff]
        %v308 = vld [vmem:[%s232 + $0x1e8] sm:$0xff]
        %v309 = vld [vmem:[%s232 + $0x1f0] sm:$0xff]
        %v310 = vld [vmem:[%s232 + $0x1f8] sm:$0xff]
        %v311 = vld [vmem:[%s225] sm:$0xff]
        %v312 = vld [vmem:[%s225 + $0x8] sm:$0xff]
        %v313 = vld [vmem:[%s225 + $0x10] sm:$0xff]
        %v314 = vld [vmem:[%s225 + $0x18] sm:$0xff]
        %v315 = vld [vmem:[%s225 + $0x20] sm:$0xff]
        %v316 = vld [vmem:[%s225 + $0x28] sm:$0xff]
        %v317 = vld [vmem:[%s225 + $0x30] sm:$0xff]
        %v318 = vld [vmem:[%s225 + $0x38] sm:$0xff]
        %v319 = vld [vmem:[%s225 + $0x40] sm:$0xff]
        %v320 = vld [vmem:[%s225 + $0x48] sm:$0xff]
        %v321 = vld [vmem:[%s225 + $0x50] sm:$0xff]
        %v322 = vld [vmem:[%s225 + $0x58] sm:$0xff]
        %v323 = vld [vmem:[%s225 + $0x60] sm:$0xff]
        %v324 = vld [vmem:[%s225 + $0x68] sm:$0xff]
        %v325 = vld [vmem:[%s225 + $0x70] sm:$0xff]
        %v326 = vld [vmem:[%s225 + $0x78] sm:$0xff]
        %v327 = vld [vmem:[%s225 + $0x80] sm:$0xff]
        %v328 = vld [vmem:[%s225 + $0x88] sm:$0xff]
        %v329 = vld [vmem:[%s225 + $0x90] sm:$0xff]
        %v330 = vld [vmem:[%s225 + $0x98] sm:$0xff]
        %v331 = vld [vmem:[%s225 + $0xa0] sm:$0xff]
        %v332 = vld [vmem:[%s225 + $0xa8] sm:$0xff]
        %v333 = vld [vmem:[%s225 + $0xb0] sm:$0xff]
        %v334 = vld [vmem:[%s225 + $0xb8] sm:$0xff]
        %v335 = vld [vmem:[%s225 + $0xc0] sm:$0xff]
        %v336 = vld [vmem:[%s225 + $0xc8] sm:$0xff]
        %v337 = vld [vmem:[%s225 + $0xd0] sm:$0xff]
        %v338 = vld [vmem:[%s225 + $0xd8] sm:$0xff]
        %v339 = vld [vmem:[%s225 + $0xe0] sm:$0xff]
        %v340 = vld [vmem:[%s225 + $0xe8] sm:$0xff]
        %v341 = vld [vmem:[%s225 + $0xf0] sm:$0xff]
        %v342 = vld [vmem:[%s225 + $0xf8] sm:$0xff]
        %v343 = vld [vmem:[%s225 + $0x100] sm:$0xff]
        %v344 = vld [vmem:[%s225 + $0x108] sm:$0xff]
        %v345 = vld [vmem:[%s225 + $0x110] sm:$0xff]
        %v346 = vld [vmem:[%s225 + $0x118] sm:$0xff]
        %v347 = vld [vmem:[%s225 + $0x120] sm:$0xff]
        %v348 = vld [vmem:[%s225 + $0x128] sm:$0xff]
        %v349 = vld [vmem:[%s225 + $0x130] sm:$0xff]
        %v350 = vld [vmem:[%s225 + $0x138] sm:$0xff]
        %v351 = vld [vmem:[%s225 + $0x140] sm:$0xff]
        %v352 = vld [vmem:[%s225 + $0x148] sm:$0xff]
        %v353 = vld [vmem:[%s225 + $0x150] sm:$0xff]
        %v354 = vld [vmem:[%s225 + $0x158] sm:$0xff]
        %v355 = vld [vmem:[%s225 + $0x160] sm:$0xff]
        %v356 = vld [vmem:[%s225 + $0x168] sm:$0xff]
        %v357 = vld [vmem:[%s225 + $0x170] sm:$0xff]
        %v358 = vld [vmem:[%s225 + $0x178] sm:$0xff]
        %v359 = vld [vmem:[%s225 + $0x180] sm:$0xff]
        %v360 = vld [vmem:[%s225 + $0x188] sm:$0xff]
        %v361 = vld [vmem:[%s225 + $0x190] sm:$0xff]
        %v362 = vld [vmem:[%s225 + $0x198] sm:$0xff]
        %v363 = vld [vmem:[%s225 + $0x1a0] sm:$0xff]
        %v364 = vld [vmem:[%s225 + $0x1a8] sm:$0xff]
        %v365 = vld [vmem:[%s225 + $0x1b0] sm:$0xff]
        %v366 = vld [vmem:[%s225 + $0x1b8] sm:$0xff]
        %v367 = vld [vmem:[%s225 + $0x1c0] sm:$0xff]
        %v368 = vld [vmem:[%s225 + $0x1c8] sm:$0xff]
        %v369 = vld [vmem:[%s225 + $0x1d0] sm:$0xff]
        %v370 = vld [vmem:[%s225 + $0x1d8] sm:$0xff]
        %v371 = vld [vmem:[%s225 + $0x1e0] sm:$0xff]
        %v372 = vld [vmem:[%s225 + $0x1e8] sm:$0xff]
        %v373 = vld [vmem:[%s225 + $0x1f0] sm:$0xff]
        %v374 = vld [vmem:[%s225 + $0x1f8] sm:$0xff]
        %v375 = vld [vmem:[%s225 + $0x200] sm:$0xff]
        %v376 = vld [vmem:[%s225 + $0x208] sm:$0xff]
        %v377 = vld [vmem:[%s225 + $0x210] sm:$0xff]
        %v378 = vld [vmem:[%s225 + $0x218] sm:$0xff]
        %v379 = vld [vmem:[%s225 + $0x220] sm:$0xff]
        %v380 = vld [vmem:[%s225 + $0x228] sm:$0xff]
        %v381 = vld [vmem:[%s225 + $0x230] sm:$0xff]
        %v382 = vld [vmem:[%s225 + $0x238] sm:$0xff]
        %v383 = vld [vmem:[%s225 + $0x240] sm:$0xff]
        %v384 = vld [vmem:[%s225 + $0x248] sm:$0xff]
        %v385 = vld [vmem:[%s225 + $0x250] sm:$0xff]
        %v386 = vld [vmem:[%s225 + $0x258] sm:$0xff]
        %v387 = vld [vmem:[%s225 + $0x260] sm:$0xff]
        %v388 = vld [vmem:[%s225 + $0x268] sm:$0xff]
        %v389 = vld [vmem:[%s225 + $0x270] sm:$0xff]
        %v390 = vld [vmem:[%s225 + $0x278] sm:$0xff]
        %v391 = vld [vmem:[%s225 + $0x280] sm:$0xff]
        %v392 = vld [vmem:[%s225 + $0x288] sm:$0xff]
        %v393 = vld [vmem:[%s225 + $0x290] sm:$0xff]
        %v394 = vld [vmem:[%s225 + $0x298] sm:$0xff]
        %v395 = vld [vmem:[%s225 + $0x2a0] sm:$0xff]
        %v396 = vld [vmem:[%s225 + $0x2a8] sm:$0xff]
        %v397 = vld [vmem:[%s225 + $0x2b0] sm:$0xff]
        %v398 = vld [vmem:[%s225 + $0x2b8] sm:$0xff]
        %v399 = vld [vmem:[%s225 + $0x2c0] sm:$0xff]
        %v400 = vld [vmem:[%s225 + $0x2c8] sm:$0xff]
        %v401 = vld [vmem:[%s225 + $0x2d0] sm:$0xff]
        %v402 = vld [vmem:[%s225 + $0x2d8] sm:$0xff]
        %v403 = vld [vmem:[%s225 + $0x2e0] sm:$0xff]
        %v404 = vld [vmem:[%s225 + $0x2e8] sm:$0xff]
        %v405 = vld [vmem:[%s225 + $0x2f0] sm:$0xff]
        %v406 = vld [vmem:[%s225 + $0x2f8] sm:$0xff]
        %v407 = vld [vmem:[%s225 + $0x300] sm:$0xff]
        %v408 = vld [vmem:[%s225 + $0x308] sm:$0xff]
        %v409 = vld [vmem:[%s225 + $0x310] sm:$0xff]
        %v410 = vld [vmem:[%s225 + $0x318] sm:$0xff]
        %v411 = vld [vmem:[%s225 + $0x320] sm:$0xff]
        %v412 = vld [vmem:[%s225 + $0x328] sm:$0xff]
        %v413 = vld [vmem:[%s225 + $0x330] sm:$0xff]
        %v414 = vld [vmem:[%s225 + $0x338] sm:$0xff]
        %v415 = vld [vmem:[%s225 + $0x340] sm:$0xff]
        %v416 = vld [vmem:[%s225 + $0x348] sm:$0xff]
        %v417 = vld [vmem:[%s225 + $0x350] sm:$0xff]
        %v418 = vld [vmem:[%s225 + $0x358] sm:$0xff]
        %v419 = vld [vmem:[%s225 + $0x360] sm:$0xff]
        %v420 = vld [vmem:[%s225 + $0x368] sm:$0xff]
        %v421 = vld [vmem:[%s225 + $0x370] sm:$0xff]
        %v422 = vld [vmem:[%s225 + $0x378] sm:$0xff]
        %v423 = vld [vmem:[%s225 + $0x380] sm:$0xff]
        %v424 = vld [vmem:[%s225 + $0x388] sm:$0xff]
        %v425 = vld [vmem:[%s225 + $0x390] sm:$0xff]
        %v426 = vld [vmem:[%s225 + $0x398] sm:$0xff]
        %v427 = vld [vmem:[%s225 + $0x3a0] sm:$0xff]
        %v428 = vld [vmem:[%s225 + $0x3a8] sm:$0xff]
        %v429 = vld [vmem:[%s225 + $0x3b0] sm:$0xff]
        %v430 = vld [vmem:[%s225 + $0x3b8] sm:$0xff]
        %v431 = vld [vmem:[%s225 + $0x3c0] sm:$0xff]
        %v432 = vld [vmem:[%s225 + $0x3c8] sm:$0xff]
        %v433 = vld [vmem:[%s225 + $0x3d0] sm:$0xff]
        %v434 = vld [vmem:[%s225 + $0x3d8] sm:$0xff]
        %v435 = vld [vmem:[%s225 + $0x3e0] sm:$0xff]
        %v436 = vld [vmem:[%s225 + $0x3e8] sm:$0xff]
        %v437 = vld [vmem:[%s225 + $0x3f0] sm:$0xff]
        %v438 = vld [vmem:[%s225 + $0x3f8] sm:$0xff]
        %440 = vset.pattern.permute.xlu0 0
        %441 = vperm.xlu0 %440, %v239
        %v442 = vpop.permute.xlu0 %441
        %445 = vset.pattern.permute.xlu0 0
        %446 = vperm.xlu0 %445, %v240
        %v447 = vpop.permute.xlu0 %446
        %450 = vset.pattern.permute.xlu0 0
        %451 = vperm.xlu0 %450, %v241
        %v452 = vpop.permute.xlu0 %451
        %455 = vset.pattern.permute.xlu0 0
        %456 = vperm.xlu0 %455, %v242
        %v457 = vpop.permute.xlu0 %456
        %460 = vset.pattern.permute.xlu0 0
        %461 = vperm.xlu0 %460, %v243
        %v462 = vpop.permute.xlu0 %461
        %465 = vset.pattern.permute.xlu0 0
        %466 = vperm.xlu0 %465, %v244
        %v467 = vpop.permute.xlu0 %466
        %470 = vset.pattern.permute.xlu0 0
        %471 = vperm.xlu0 %470, %v245
        %v472 = vpop.permute.xlu0 %471
        %475 = vset.pattern.permute.xlu0 0
        %476 = vperm.xlu0 %475, %v246
        %v477 = vpop.permute.xlu0 %476
        %v479 = vmul.f32 %v311, %v442
        %v480 = vmul.f32 %v312, %v442
        %v481 = vmul.f32 %v313, %v447
        %v482 = vmul.f32 %v314, %v447
        %v483 = vmul.f32 %v315, %v452
        %v484 = vmul.f32 %v316, %v452
        %v485 = vmul.f32 %v317, %v457
        %v486 = vmul.f32 %v318, %v457
        %v487 = vmul.f32 %v319, %v462
        %v488 = vmul.f32 %v320, %v462
        %v489 = vmul.f32 %v321, %v467
        %v490 = vmul.f32 %v322, %v467
        %v491 = vmul.f32 %v323, %v472
        %v492 = vmul.f32 %v324, %v472
        %v493 = vmul.f32 %v325, %v477
        %v494 = vmul.f32 %v326, %v477
        %v495 = vmul.f32 %v327, %v442
        %v496 = vmul.f32 %v328, %v442
        %v497 = vmul.f32 %v329, %v447
        %v498 = vmul.f32 %v330, %v447
        %v499 = vmul.f32 %v331, %v452
        %v500 = vmul.f32 %v332, %v452
        %v501 = vmul.f32 %v333, %v457
        %v502 = vmul.f32 %v334, %v457
        %v503 = vmul.f32 %v335, %v462
        %v504 = vmul.f32 %v336, %v462
        %v505 = vmul.f32 %v337, %v467
        %v506 = vmul.f32 %v338, %v467
        %v507 = vmul.f32 %v339, %v472
        %v508 = vmul.f32 %v340, %v472
        %v509 = vmul.f32 %v341, %v477
        %v510 = vmul.f32 %v342, %v477
        %v511 = vmul.f32 %v343, %v442
        %v512 = vmul.f32 %v344, %v442
        %v513 = vmul.f32 %v345, %v447
        %v514 = vmul.f32 %v346, %v447
        %v515 = vmul.f32 %v347, %v452
        %v516 = vmul.f32 %v348, %v452
        %v517 = vmul.f32 %v349, %v457
        %v518 = vmul.f32 %v350, %v457
        %v519 = vmul.f32 %v351, %v462
        %v520 = vmul.f32 %v352, %v462
        %v521 = vmul.f32 %v353, %v467
        %v522 = vmul.f32 %v354, %v467
        %v523 = vmul.f32 %v355, %v472
        %v524 = vmul.f32 %v356, %v472
        %v525 = vmul.f32 %v357, %v477
        %v526 = vmul.f32 %v358, %v477
        %v527 = vmul.f32 %v359, %v442
        %v528 = vmul.f32 %v360, %v442
        %v529 = vmul.f32 %v361, %v447
        %v530 = vmul.f32 %v362, %v447
        %v531 = vmul.f32 %v363, %v452
        %v532 = vmul.f32 %v364, %v452
        %v533 = vmul.f32 %v365, %v457
        %v534 = vmul.f32 %v366, %v457
        %v535 = vmul.f32 %v367, %v462
        %v536 = vmul.f32 %v368, %v462
        %v537 = vmul.f32 %v369, %v467
        %v538 = vmul.f32 %v370, %v467
        %v539 = vmul.f32 %v371, %v472
        %v540 = vmul.f32 %v372, %v472
        %v541 = vmul.f32 %v373, %v477
        %v542 = vmul.f32 %v374, %v477
        %v543 = vmul.f32 %v375, %v442
        %v544 = vmul.f32 %v376, %v442
        %v545 = vmul.f32 %v377, %v447
        %v546 = vmul.f32 %v378, %v447
        %v547 = vmul.f32 %v379, %v452
        %v548 = vmul.f32 %v380, %v452
        %v549 = vmul.f32 %v381, %v457
        %v550 = vmul.f32 %v382, %v457
        %v551 = vmul.f32 %v383, %v462
        %v552 = vmul.f32 %v384, %v462
        %v553 = vmul.f32 %v385, %v467
        %v554 = vmul.f32 %v386, %v467
        %v555 = vmul.f32 %v387, %v472
        %v556 = vmul.f32 %v388, %v472
        %v557 = vmul.f32 %v389, %v477
        %v558 = vmul.f32 %v390, %v477
        %v559 = vmul.f32 %v391, %v442
        %v560 = vmul.f32 %v392, %v442
        %v561 = vmul.f32 %v393, %v447
        %v562 = vmul.f32 %v394, %v447
        %v563 = vmul.f32 %v395, %v452
        %v564 = vmul.f32 %v396, %v452
        %v565 = vmul.f32 %v397, %v457
        %v566 = vmul.f32 %v398, %v457
        %v567 = vmul.f32 %v399, %v462
        %v568 = vmul.f32 %v400, %v462
        %v569 = vmul.f32 %v401, %v467
        %v570 = vmul.f32 %v402, %v467
        %v571 = vmul.f32 %v403, %v472
        %v572 = vmul.f32 %v404, %v472
        %v573 = vmul.f32 %v405, %v477
        %v574 = vmul.f32 %v406, %v477
        %v575 = vmul.f32 %v407, %v442
        %v576 = vmul.f32 %v408, %v442
        %v577 = vmul.f32 %v409, %v447
        %v578 = vmul.f32 %v410, %v447
        %v579 = vmul.f32 %v411, %v452
        %v580 = vmul.f32 %v412, %v452
        %v581 = vmul.f32 %v413, %v457
        %v582 = vmul.f32 %v414, %v457
        %v583 = vmul.f32 %v415, %v462
        %v584 = vmul.f32 %v416, %v462
        %v585 = vmul.f32 %v417, %v467
        %v586 = vmul.f32 %v418, %v467
        %v587 = vmul.f32 %v419, %v472
        %v588 = vmul.f32 %v420, %v472
        %v589 = vmul.f32 %v421, %v477
        %v590 = vmul.f32 %v422, %v477
        %v591 = vmul.f32 %v423, %v442
        %v592 = vmul.f32 %v424, %v442
        %v593 = vmul.f32 %v425, %v447
        %v594 = vmul.f32 %v426, %v447
        %v595 = vmul.f32 %v427, %v452
        %v596 = vmul.f32 %v428, %v452
        %v597 = vmul.f32 %v429, %v457
        %v598 = vmul.f32 %v430, %v457
        %v599 = vmul.f32 %v431, %v462
        %v600 = vmul.f32 %v432, %v462
        %v601 = vmul.f32 %v433, %v467
        %v602 = vmul.f32 %v434, %v467
        %v603 = vmul.f32 %v435, %v472
        %v604 = vmul.f32 %v436, %v472
        %v605 = vmul.f32 %v437, %v477
        %v606 = vmul.f32 %v438, %v477
        %v607 = vadd.f32 %v479, %v481
        %v608 = vadd.f32 %v607, %v483
        %v609 = vadd.f32 %v608, %v485
        %v610 = vadd.f32 %v609, %v487
        %v611 = vadd.f32 %v610, %v489
        %v612 = vadd.f32 %v611, %v491
        %v613 = vadd.f32 %v612, %v493
        %v614 = vrot.slane %v613, 4
        %v615 = vadd.f32 %v613, %v614
        %v616 = vrot.slane %v615, 2
        %v617 = vadd.f32 %v615, %v616
        %v618 = vrot.slane %v617, 1
        %v619 = vadd.f32 %v617, %v618
        %v620 = vadd.f32 %v480, %v482
        %v621 = vadd.f32 %v620, %v484
        %v622 = vadd.f32 %v621, %v486
        %v623 = vadd.f32 %v622, %v488
        %v624 = vadd.f32 %v623, %v490
        %v625 = vadd.f32 %v624, %v492
        %v626 = vadd.f32 %v625, %v494
        %v627 = vrot.slane %v626, 4
        %v628 = vadd.f32 %v626, %v627
        %v629 = vrot.slane %v628, 2
        %v630 = vadd.f32 %v628, %v629
        %v631 = vrot.slane %v630, 1
        %v632 = vadd.f32 %v630, %v631
        %v633 = vadd.f32 %v495, %v497
        %v634 = vadd.f32 %v633, %v499
        %v635 = vadd.f32 %v634, %v501
        %v636 = vadd.f32 %v635, %v503
        %v637 = vadd.f32 %v636, %v505
        %v638 = vadd.f32 %v637, %v507
        %v639 = vadd.f32 %v638, %v509
        %v640 = vrot.slane %v639, 4
        %v641 = vadd.f32 %v639, %v640
        %v642 = vrot.slane %v641, 2
        %v643 = vadd.f32 %v641, %v642
        %v644 = vrot.slane %v643, 1
        %v645 = vadd.f32 %v643, %v644
        %v646 = vadd.f32 %v496, %v498
        %v647 = vadd.f32 %v646, %v500
        %v648 = vadd.f32 %v647, %v502
        %v649 = vadd.f32 %v648, %v504
        %v650 = vadd.f32 %v649, %v506
        %v651 = vadd.f32 %v650, %v508
        %v652 = vadd.f32 %v651, %v510
        %v653 = vrot.slane %v652, 4
        %v654 = vadd.f32 %v652, %v653
        %v655 = vrot.slane %v654, 2
        %v656 = vadd.f32 %v654, %v655
        %v657 = vrot.slane %v656, 1
        %v658 = vadd.f32 %v656, %v657
        %v659 = vadd.f32 %v511, %v513
        %v660 = vadd.f32 %v659, %v515
        %v661 = vadd.f32 %v660, %v517
        %v662 = vadd.f32 %v661, %v519
        %v663 = vadd.f32 %v662, %v521
        %v664 = vadd.f32 %v663, %v523
        %v665 = vadd.f32 %v664, %v525
        %v666 = vrot.slane %v665, 4
        %v667 = vadd.f32 %v665, %v666
        %v668 = vrot.slane %v667, 2
        %v669 = vadd.f32 %v667, %v668
        %v670 = vrot.slane %v669, 1
        %v671 = vadd.f32 %v669, %v670
        %v672 = vadd.f32 %v512, %v514
        %v673 = vadd.f32 %v672, %v516
        %v674 = vadd.f32 %v673, %v518
        %v675 = vadd.f32 %v674, %v520
        %v676 = vadd.f32 %v675, %v522
        %v677 = vadd.f32 %v676, %v524
        %v678 = vadd.f32 %v677, %v526
        %v679 = vrot.slane %v678, 4
        %v680 = vadd.f32 %v678, %v679
        %v681 = vrot.slane %v680, 2
        %v682 = vadd.f32 %v680, %v681
        %v683 = vrot.slane %v682, 1
        %v684 = vadd.f32 %v682, %v683
        %v685 = vadd.f32 %v527, %v529
        %v686 = vadd.f32 %v685, %v531
        %v687 = vadd.f32 %v686, %v533
        %v688 = vadd.f32 %v687, %v535
        %v689 = vadd.f32 %v688, %v537
        %v690 = vadd.f32 %v689, %v539
        %v691 = vadd.f32 %v690, %v541
        %v692 = vrot.slane %v691, 4
        %v693 = vadd.f32 %v691, %v692
        %v694 = vrot.slane %v693, 2
        %v695 = vadd.f32 %v693, %v694
        %v696 = vrot.slane %v695, 1
        %v697 = vadd.f32 %v695, %v696
        %v698 = vadd.f32 %v528, %v530
        %v699 = vadd.f32 %v698, %v532
        %v700 = vadd.f32 %v699, %v534
        %v701 = vadd.f32 %v700, %v536
        %v702 = vadd.f32 %v701, %v538
        %v703 = vadd.f32 %v702, %v540
        %v704 = vadd.f32 %v703, %v542
        %v705 = vrot.slane %v704, 4
        %v706 = vadd.f32 %v704, %v705
        %v707 = vrot.slane %v706, 2
        %v708 = vadd.f32 %v706, %v707
        %v709 = vrot.slane %v708, 1
        %v710 = vadd.f32 %v708, %v709
        %v711 = vadd.f32 %v543, %v545
        %v712 = vadd.f32 %v711, %v547
        %v713 = vadd.f32 %v712, %v549
        %v714 = vadd.f32 %v713, %v551
        %v715 = vadd.f32 %v714, %v553
        %v716 = vadd.f32 %v715, %v555
        %v717 = vadd.f32 %v716, %v557
        %v718 = vrot.slane %v717, 4
        %v719 = vadd.f32 %v717, %v718
        %v720 = vrot.slane %v719, 2
        %v721 = vadd.f32 %v719, %v720
        %v722 = vrot.slane %v721, 1
        %v723 = vadd.f32 %v721, %v722
        %v724 = vadd.f32 %v544, %v546
        %v725 = vadd.f32 %v724, %v548
        %v726 = vadd.f32 %v725, %v550
        %v727 = vadd.f32 %v726, %v552
        %v728 = vadd.f32 %v727, %v554
        %v729 = vadd.f32 %v728, %v556
        %v730 = vadd.f32 %v729, %v558
        %v731 = vrot.slane %v730, 4
        %v732 = vadd.f32 %v730, %v731
        %v733 = vrot.slane %v732, 2
        %v734 = vadd.f32 %v732, %v733
        %v735 = vrot.slane %v734, 1
        %v736 = vadd.f32 %v734, %v735
        %v737 = vadd.f32 %v559, %v561
        %v738 = vadd.f32 %v737, %v563
        %v739 = vadd.f32 %v738, %v565
        %v740 = vadd.f32 %v739, %v567
        %v741 = vadd.f32 %v740, %v569
        %v742 = vadd.f32 %v741, %v571
        %v743 = vadd.f32 %v742, %v573
        %v744 = vrot.slane %v743, 4
        %v745 = vadd.f32 %v743, %v744
        %v746 = vrot.slane %v745, 2
        %v747 = vadd.f32 %v745, %v746
        %v748 = vrot.slane %v747, 1
        %v749 = vadd.f32 %v747, %v748
        %v750 = vadd.f32 %v560, %v562
        %v751 = vadd.f32 %v750, %v564
        %v752 = vadd.f32 %v751, %v566
        %v753 = vadd.f32 %v752, %v568
        %v754 = vadd.f32 %v753, %v570
        %v755 = vadd.f32 %v754, %v572
        %v756 = vadd.f32 %v755, %v574
        %v757 = vrot.slane %v756, 4
        %v758 = vadd.f32 %v756, %v757
        %v759 = vrot.slane %v758, 2
        %v760 = vadd.f32 %v758, %v759
        %v761 = vrot.slane %v760, 1
        %v762 = vadd.f32 %v760, %v761
        %v763 = vadd.f32 %v575, %v577
        %v764 = vadd.f32 %v763, %v579
        %v765 = vadd.f32 %v764, %v581
        %v766 = vadd.f32 %v765, %v583
        %v767 = vadd.f32 %v766, %v585
        %v768 = vadd.f32 %v767, %v587
        %v769 = vadd.f32 %v768, %v589
        %v770 = vrot.slane %v769, 4
        %v771 = vadd.f32 %v769, %v770
        %v772 = vrot.slane %v771, 2
        %v773 = vadd.f32 %v771, %v772
        %v774 = vrot.slane %v773, 1
        %v775 = vadd.f32 %v773, %v774
        %v776 = vadd.f32 %v576, %v578
        %v777 = vadd.f32 %v776, %v580
        %v778 = vadd.f32 %v777, %v582
        %v779 = vadd.f32 %v778, %v584
        %v780 = vadd.f32 %v779, %v586
        %v781 = vadd.f32 %v780, %v588
        %v782 = vadd.f32 %v781, %v590
        %v783 = vrot.slane %v782, 4
        %v784 = vadd.f32 %v782, %v783
        %v785 = vrot.slane %v784, 2
        %v786 = vadd.f32 %v784, %v785
        %v787 = vrot.slane %v786, 1
        %v788 = vadd.f32 %v786, %v787
        %v789 = vadd.f32 %v591, %v593
        %v790 = vadd.f32 %v789, %v595
        %v791 = vadd.f32 %v790, %v597
        %v792 = vadd.f32 %v791, %v599
        %v793 = vadd.f32 %v792, %v601
        %v794 = vadd.f32 %v793, %v603
        %v795 = vadd.f32 %v794, %v605
        %v796 = vrot.slane %v795, 4
        %v797 = vadd.f32 %v795, %v796
        %v798 = vrot.slane %v797, 2
        %v799 = vadd.f32 %v797, %v798
        %v800 = vrot.slane %v799, 1
        %v801 = vadd.f32 %v799, %v800
        %v802 = vadd.f32 %v592, %v594
        %v803 = vadd.f32 %v802, %v596
        %v804 = vadd.f32 %v803, %v598
        %v805 = vadd.f32 %v804, %v600
        %v806 = vadd.f32 %v805, %v602
        %v807 = vadd.f32 %v806, %v604
        %v808 = vadd.f32 %v807, %v606
        %v809 = vrot.slane %v808, 4
        %v810 = vadd.f32 %v808, %v809
        %v811 = vrot.slane %v810, 2
        %v812 = vadd.f32 %v810, %v811
        %v813 = vrot.slane %v812, 1
        %v814 = vadd.f32 %v812, %v813
        %v815 = vmul.f32 %v247, %v239
        %v816 = vmul.f32 %v248, %v240
        %v817 = vmul.f32 %v249, %v241
        %v818 = vmul.f32 %v250, %v242
        %v819 = vmul.f32 %v251, %v243
        %v820 = vmul.f32 %v252, %v244
        %v821 = vmul.f32 %v253, %v245
        %v822 = vmul.f32 %v254, %v246
        %v823 = vmul.f32 %v255, %v239
        %v824 = vmul.f32 %v256, %v240
        %v825 = vmul.f32 %v257, %v241
        %v826 = vmul.f32 %v258, %v242
        %v827 = vmul.f32 %v259, %v243
        %v828 = vmul.f32 %v260, %v244
        %v829 = vmul.f32 %v261, %v245
        %v830 = vmul.f32 %v262, %v246
        %v831 = vmul.f32 %v263, %v239
        %v832 = vmul.f32 %v264, %v240
        %v833 = vmul.f32 %v265, %v241
        %v834 = vmul.f32 %v266, %v242
        %v835 = vmul.f32 %v267, %v243
        %v836 = vmul.f32 %v268, %v244
        %v837 = vmul.f32 %v269, %v245
        %v838 = vmul.f32 %v270, %v246
        %v839 = vmul.f32 %v271, %v239
        %v840 = vmul.f32 %v272, %v240
        %v841 = vmul.f32 %v273, %v241
        %v842 = vmul.f32 %v274, %v242
        %v843 = vmul.f32 %v275, %v243
        %v844 = vmul.f32 %v276, %v244
        %v845 = vmul.f32 %v277, %v245
        %v846 = vmul.f32 %v278, %v246
        %v847 = vmul.f32 %v279, %v239
        %v848 = vmul.f32 %v280, %v240
        %v849 = vmul.f32 %v281, %v241
        %v850 = vmul.f32 %v282, %v242
        %v851 = vmul.f32 %v283, %v243
        %v852 = vmul.f32 %v284, %v244
        %v853 = vmul.f32 %v285, %v245
        %v854 = vmul.f32 %v286, %v246
        %v855 = vmul.f32 %v287, %v239
        %v856 = vmul.f32 %v288, %v240
        %v857 = vmul.f32 %v289, %v241
        %v858 = vmul.f32 %v290, %v242
        %v859 = vmul.f32 %v291, %v243
        %v860 = vmul.f32 %v292, %v244
        %v861 = vmul.f32 %v293, %v245
        %v862 = vmul.f32 %v294, %v246
        %v863 = vmul.f32 %v295, %v239
        %v864 = vmul.f32 %v296, %v240
        %v865 = vmul.f32 %v297, %v241
        %v866 = vmul.f32 %v298, %v242
        %v867 = vmul.f32 %v299, %v243
        %v868 = vmul.f32 %v300, %v244
        %v869 = vmul.f32 %v301, %v245
        %v870 = vmul.f32 %v302, %v246
        %v871 = vmul.f32 %v303, %v239
        %v872 = vmul.f32 %v304, %v240
        %v873 = vmul.f32 %v305, %v241
        %v874 = vmul.f32 %v306, %v242
        %v875 = vmul.f32 %v307, %v243
        %v876 = vmul.f32 %v308, %v244
        %v877 = vmul.f32 %v309, %v245
        %v878 = vmul.f32 %v310, %v246
        %vm879 = vcmask 7168
        %v880 = vsel %vm879, %v815, 0.0
        %v881 = vsel %vm879, %v816, 0.0
        %v882 = vadd.f32 %v880, %v881
        %v883 = vsel %vm879, %v817, 0.0
        %v884 = vadd.f32 %v882, %v883
        %v885 = vsel %vm879, %v818, 0.0
        %v886 = vadd.f32 %v884, %v885
        %v887 = vsel %vm879, %v819, 0.0
        %v888 = vadd.f32 %v886, %v887
        %v889 = vsel %vm879, %v820, 0.0
        %v890 = vadd.f32 %v888, %v889
        %v891 = vsel %vm879, %v821, 0.0
        %v892 = vadd.f32 %v890, %v891
        %v893 = vsel %vm879, %v822, 0.0
        %v894 = vadd.f32 %v892, %v893
        %v895 = vrot.slane %v894, 4
        %v896 = vadd.f32 %v894, %v895
        %v897 = vrot.slane %v896, 2
        %v898 = vadd.f32 %v896, %v897
        %v899 = vrot.slane %v898, 1
        %v900 = vadd.f32 %v898, %v899
        %v901 = vsel %vm879, %v823, 0.0
        %v902 = vsel %vm879, %v824, 0.0
        %v903 = vadd.f32 %v901, %v902
        %v904 = vsel %vm879, %v825, 0.0
        %v905 = vadd.f32 %v903, %v904
        %v906 = vsel %vm879, %v826, 0.0
        %v907 = vadd.f32 %v905, %v906
        %v908 = vsel %vm879, %v827, 0.0
        %v909 = vadd.f32 %v907, %v908
        %v910 = vsel %vm879, %v828, 0.0
        %v911 = vadd.f32 %v909, %v910
        %v912 = vsel %vm879, %v829, 0.0
        %v913 = vadd.f32 %v911, %v912
        %v914 = vsel %vm879, %v830, 0.0
        %v915 = vadd.f32 %v913, %v914
        %v916 = vrot.slane %v915, 4
        %v917 = vadd.f32 %v915, %v916
        %v918 = vrot.slane %v917, 2
        %v919 = vadd.f32 %v917, %v918
        %v920 = vrot.slane %v919, 1
        %v921 = vadd.f32 %v919, %v920
        %v922 = vsel %vm879, %v831, 0.0
        %v923 = vsel %vm879, %v832, 0.0
        %v924 = vadd.f32 %v922, %v923
        %v925 = vsel %vm879, %v833, 0.0
        %v926 = vadd.f32 %v924, %v925
        %v927 = vsel %vm879, %v834, 0.0
        %v928 = vadd.f32 %v926, %v927
        %v929 = vsel %vm879, %v835, 0.0
        %v930 = vadd.f32 %v928, %v929
        %v931 = vsel %vm879, %v836, 0.0
        %v932 = vadd.f32 %v930, %v931
        %v933 = vsel %vm879, %v837, 0.0
        %v934 = vadd.f32 %v932, %v933
        %v935 = vsel %vm879, %v838, 0.0
        %v936 = vadd.f32 %v934, %v935
        %v937 = vrot.slane %v936, 4
        %v938 = vadd.f32 %v936, %v937
        %v939 = vrot.slane %v938, 2
        %v940 = vadd.f32 %v938, %v939
        %v941 = vrot.slane %v940, 1
        %v942 = vadd.f32 %v940, %v941
        %v943 = vsel %vm879, %v839, 0.0
        %v944 = vsel %vm879, %v840, 0.0
        %v945 = vadd.f32 %v943, %v944
        %v946 = vsel %vm879, %v841, 0.0
        %v947 = vadd.f32 %v945, %v946
        %v948 = vsel %vm879, %v842, 0.0
        %v949 = vadd.f32 %v947, %v948
        %v950 = vsel %vm879, %v843, 0.0
        %v951 = vadd.f32 %v949, %v950
        %v952 = vsel %vm879, %v844, 0.0
        %v953 = vadd.f32 %v951, %v952
        %v954 = vsel %vm879, %v845, 0.0
        %v955 = vadd.f32 %v953, %v954
        %v956 = vsel %vm879, %v846, 0.0
        %v957 = vadd.f32 %v955, %v956
        %v958 = vrot.slane %v957, 4
        %v959 = vadd.f32 %v957, %v958
        %v960 = vrot.slane %v959, 2
        %v961 = vadd.f32 %v959, %v960
        %v962 = vrot.slane %v961, 1
        %v963 = vadd.f32 %v961, %v962
        %v964 = vsel %vm879, %v847, 0.0
        %v965 = vsel %vm879, %v848, 0.0
        %v966 = vadd.f32 %v964, %v965
        %v967 = vsel %vm879, %v849, 0.0
        %v968 = vadd.f32 %v966, %v967
        %v969 = vsel %vm879, %v850, 0.0
        %v970 = vadd.f32 %v968, %v969
        %v971 = vsel %vm879, %v851, 0.0
        %v972 = vadd.f32 %v970, %v971
        %v973 = vsel %vm879, %v852, 0.0
        %v974 = vadd.f32 %v972, %v973
        %v975 = vsel %vm879, %v853, 0.0
        %v976 = vadd.f32 %v974, %v975
        %v977 = vsel %vm879, %v854, 0.0
        %v978 = vadd.f32 %v976, %v977
        %v979 = vrot.slane %v978, 4
        %v980 = vadd.f32 %v978, %v979
        %v981 = vrot.slane %v980, 2
        %v982 = vadd.f32 %v980, %v981
        %v983 = vrot.slane %v982, 1
        %v984 = vadd.f32 %v982, %v983
        %v985 = vsel %vm879, %v855, 0.0
        %v986 = vsel %vm879, %v856, 0.0
        %v987 = vadd.f32 %v985, %v986
        %v988 = vsel %vm879, %v857, 0.0
        %v989 = vadd.f32 %v987, %v988
        %v990 = vsel %vm879, %v858, 0.0
        %v991 = vadd.f32 %v989, %v990
        %v992 = vsel %vm879, %v859, 0.0
        %v993 = vadd.f32 %v991, %v992
        %v994 = vsel %vm879, %v860, 0.0
        %v995 = vadd.f32 %v993, %v994
        %v996 = vsel %vm879, %v861, 0.0
        %v997 = vadd.f32 %v995, %v996
        %v998 = vsel %vm879, %v862, 0.0
        %v999 = vadd.f32 %v997, %v998
        %v1000 = vrot.slane %v999, 4
        %v1001 = vadd.f32 %v999, %v1000
        %v1002 = vrot.slane %v1001, 2
        %v1003 = vadd.f32 %v1001, %v1002
        %v1004 = vrot.slane %v1003, 1
        %v1005 = vadd.f32 %v1003, %v1004
        %v1006 = vsel %vm879, %v863, 0.0
        %v1007 = vsel %vm879, %v864, 0.0
        %v1008 = vadd.f32 %v1006, %v1007
        %v1009 = vsel %vm879, %v865, 0.0
        %v1010 = vadd.f32 %v1008, %v1009
        %v1011 = vsel %vm879, %v866, 0.0
        %v1012 = vadd.f32 %v1010, %v1011
        %v1013 = vsel %vm879, %v867, 0.0
        %v1014 = vadd.f32 %v1012, %v1013
        %v1015 = vsel %vm879, %v868, 0.0
        %v1016 = vadd.f32 %v1014, %v1015
        %v1017 = vsel %vm879, %v869, 0.0
        %v1018 = vadd.f32 %v1016, %v1017
        %v1019 = vsel %vm879, %v870, 0.0
        %v1020 = vadd.f32 %v1018, %v1019
        %v1021 = vrot.slane %v1020, 4
        %v1022 = vadd.f32 %v1020, %v1021
        %v1023 = vrot.slane %v1022, 2
        %v1024 = vadd.f32 %v1022, %v1023
        %v1025 = vrot.slane %v1024, 1
        %v1026 = vadd.f32 %v1024, %v1025
        %v1027 = vsel %vm879, %v871, 0.0
        %v1028 = vsel %vm879, %v872, 0.0
        %v1029 = vadd.f32 %v1027, %v1028
        %v1030 = vsel %vm879, %v873, 0.0
        %v1031 = vadd.f32 %v1029, %v1030
        %v1032 = vsel %vm879, %v874, 0.0
        %v1033 = vadd.f32 %v1031, %v1032
        %v1034 = vsel %vm879, %v875, 0.0
        %v1035 = vadd.f32 %v1033, %v1034
        %v1036 = vsel %vm879, %v876, 0.0
        %v1037 = vadd.f32 %v1035, %v1036
        %v1038 = vsel %vm879, %v877, 0.0
        %v1039 = vadd.f32 %v1037, %v1038
        %v1040 = vsel %vm879, %v878, 0.0
        %v1041 = vadd.f32 %v1039, %v1040
        %v1042 = vrot.slane %v1041, 4
        %v1043 = vadd.f32 %v1041, %v1042
        %v1044 = vrot.slane %v1043, 2
        %v1045 = vadd.f32 %v1043, %v1044
        %v1046 = vrot.slane %v1045, 1
        %v1047 = vadd.f32 %v1045, %v1046
        %1049 = vset.pattern.permute.xlu0 0
        %1050 = vperm.xlu0 %1049, %v900
        %v1051 = vpop.permute.xlu0 %1050
        %1054 = vset.pattern.permute.xlu0 0
        %1055 = vperm.xlu0 %1054, %v921
        %v1056 = vpop.permute.xlu0 %1055
        %1059 = vset.pattern.permute.xlu0 0
        %1060 = vperm.xlu0 %1059, %v942
        %v1061 = vpop.permute.xlu0 %1060
        %1064 = vset.pattern.permute.xlu0 0
        %1065 = vperm.xlu0 %1064, %v963
        %v1066 = vpop.permute.xlu0 %1065
        %1069 = vset.pattern.permute.xlu0 0
        %1070 = vperm.xlu0 %1069, %v984
        %v1071 = vpop.permute.xlu0 %1070
        %1074 = vset.pattern.permute.xlu0 0
        %1075 = vperm.xlu0 %1074, %v1005
        %v1076 = vpop.permute.xlu0 %1075
        %1079 = vset.pattern.permute.xlu0 0
        %1080 = vperm.xlu0 %1079, %v1026
        %v1081 = vpop.permute.xlu0 %1080
        %1084 = vset.pattern.permute.xlu0 0
        %1085 = vperm.xlu0 %1084, %v1047
        %v1086 = vpop.permute.xlu0 %1085
        %v1088 = vadd.f32 %v619, %v1051
        %v1089 = vadd.f32 %v632, %v1051
        %v1090 = vadd.f32 %v645, %v1056
        %v1091 = vadd.f32 %v658, %v1056
        %v1092 = vadd.f32 %v671, %v1061
        %v1093 = vadd.f32 %v684, %v1061
        %v1094 = vadd.f32 %v697, %v1066
        %v1095 = vadd.f32 %v710, %v1066
        %v1096 = vadd.f32 %v723, %v1071
        %v1097 = vadd.f32 %v736, %v1071
        %v1098 = vadd.f32 %v749, %v1076
        %v1099 = vadd.f32 %v762, %v1076
        %v1100 = vadd.f32 %v775, %v1081
        %v1101 = vadd.f32 %v788, %v1081
        %v1102 = vadd.f32 %v801, %v1086
        %v1103 = vadd.f32 %v814, %v1086
        %vm1120 = vcmask 1041409
        %v1121 = vsel %vm1120, %v1090, %v1088
        %vm1122 = vcmask 1042434
        %v1123 = vsel %vm1122, %v1092, %v1121
        %vm1124 = vcmask 1043459
        %v1125 = vsel %vm1124, %v1094, %v1123
        %vm1126 = vcmask 1044484
        %v1127 = vsel %vm1126, %v1096, %v1125
        %vm1128 = vcmask 1045509
        %v1129 = vsel %vm1128, %v1098, %v1127
        %vm1130 = vcmask 1046534
        %v1131 = vsel %vm1130, %v1100, %v1129
        %vm1132 = vcmask 1047559
        %v1133 = vsel %vm1132, %v1102, %v1131
        %v1134 = vsel %vm1120, %v1091, %v1089
        %v1135 = vsel %vm1122, %v1093, %v1134
        %v1136 = vsel %vm1124, %v1095, %v1135
        %v1137 = vsel %vm1126, %v1097, %v1136
        %v1138 = vsel %vm1128, %v1099, %v1137
        %v1139 = vsel %vm1130, %v1101, %v1138
        %v1140 = vsel %vm1132, %v1103, %v1139
        %1143 = vst [vmem:[%s238] sm:$0xff] %v1133
        %1144 = vst [vmem:[%s238 + $0x8] sm:$0xff] %v1140
        %v1161 = vsel %vm1120, %v645, %v619
        %v1162 = vsel %vm1122, %v671, %v1161
        %v1163 = vsel %vm1124, %v697, %v1162
        %v1164 = vsel %vm1126, %v723, %v1163
        %v1165 = vsel %vm1128, %v749, %v1164
        %v1166 = vsel %vm1130, %v775, %v1165
        %v1167 = vsel %vm1132, %v801, %v1166
        %v1168 = vsel %vm1120, %v658, %v632
        %v1169 = vsel %vm1122, %v684, %v1168
        %v1170 = vsel %vm1124, %v710, %v1169
        %v1171 = vsel %vm1126, %v736, %v1170
        %v1172 = vsel %vm1128, %v762, %v1171
        %v1173 = vsel %vm1130, %v788, %v1172
        %v1174 = vsel %vm1132, %v814, %v1173
        %v1177 = vmax.f32 %v1167, %v1174
        %1178 = vmax.xlane.f32.xlu0 %v1177
        %v1179 = vpop.xlane.xlu0 %1178
        %v1181 = vrot.slane %v1179, 1
        %v1182 = vrot.slane %v1179, 2
        %v1183 = vrot.slane %v1179, 3
        %v1184 = vrot.slane %v1179, 4
        %v1185 = vrot.slane %v1179, 5
        %v1186 = vrot.slane %v1179, 6
        %v1187 = vrot.slane %v1179, 7
        %v1196 = vsub.f32 %v619, %v1179
        %v1197 = vsub.f32 %v632, %v1179
        %v1198 = vsub.f32 %v645, %v1181
        %v1199 = vsub.f32 %v658, %v1181
        %v1200 = vsub.f32 %v671, %v1182
        %v1201 = vsub.f32 %v684, %v1182
        %v1202 = vsub.f32 %v697, %v1183
        %v1203 = vsub.f32 %v710, %v1183
        %v1204 = vsub.f32 %v723, %v1184
        %v1205 = vsub.f32 %v736, %v1184
        %v1206 = vsub.f32 %v749, %v1185
        %v1207 = vsub.f32 %v762, %v1185
        %v1208 = vsub.f32 %v775, %v1186
        %v1209 = vsub.f32 %v788, %v1186
        %v1210 = vsub.f32 %v801, %v1187
        %v1211 = vsub.f32 %v814, %v1187
        %v1212 = vmul.f32 %v1196, 1.442695
        %v1213 = vpow.pop %v1212
        %v1214 = vmul.f32 %v1197, 1.442695
        %v1215 = vpow.pop %v1214
        %v1216 = vmul.f32 %v1198, 1.442695
        %v1217 = vpow.pop %v1216
        %v1218 = vmul.f32 %v1199, 1.442695
        %v1219 = vpow.pop %v1218
        %v1220 = vmul.f32 %v1200, 1.442695
        %v1221 = vpow.pop %v1220
        %v1222 = vmul.f32 %v1201, 1.442695
        %v1223 = vpow.pop %v1222
        %v1224 = vmul.f32 %v1202, 1.442695
        %v1225 = vpow.pop %v1224
        %v1226 = vmul.f32 %v1203, 1.442695
        %v1227 = vpow.pop %v1226
        %v1228 = vmul.f32 %v1204, 1.442695
        %v1229 = vpow.pop %v1228
        %v1230 = vmul.f32 %v1205, 1.442695
        %v1231 = vpow.pop %v1230
        %v1232 = vmul.f32 %v1206, 1.442695
        %v1233 = vpow.pop %v1232
        %v1234 = vmul.f32 %v1207, 1.442695
        %v1235 = vpow.pop %v1234
        %v1236 = vmul.f32 %v1208, 1.442695
        %v1237 = vpow.pop %v1236
        %v1238 = vmul.f32 %v1209, 1.442695
        %v1239 = vpow.pop %v1238
        %v1240 = vmul.f32 %v1210, 1.442695
        %v1241 = vpow.pop %v1240
        %v1242 = vmul.f32 %v1211, 1.442695
        %v1243 = vpow.pop %v1242
        %v1260 = vrot.slane %v1217, 7
        %v1261 = vsel %vm1120, %v1260, %v1213
        %v1262 = vrot.slane %v1221, 6
        %v1263 = vsel %vm1122, %v1262, %v1261
        %v1264 = vrot.slane %v1225, 5
        %v1265 = vsel %vm1124, %v1264, %v1263
        %v1266 = vrot.slane %v1229, 4
        %v1267 = vsel %vm1126, %v1266, %v1265
        %v1268 = vrot.slane %v1233, 3
        %v1269 = vsel %vm1128, %v1268, %v1267
        %v1270 = vrot.slane %v1237, 2
        %v1271 = vsel %vm1130, %v1270, %v1269
        %v1272 = vrot.slane %v1241, 1
        %v1273 = vsel %vm1132, %v1272, %v1271
        %v1274 = vrot.slane %v1219, 7
        %v1275 = vsel %vm1120, %v1274, %v1215
        %v1276 = vrot.slane %v1223, 6
        %v1277 = vsel %vm1122, %v1276, %v1275
        %v1278 = vrot.slane %v1227, 5
        %v1279 = vsel %vm1124, %v1278, %v1277
        %v1280 = vrot.slane %v1231, 4
        %v1281 = vsel %vm1126, %v1280, %v1279
        %v1282 = vrot.slane %v1235, 3
        %v1283 = vsel %vm1128, %v1282, %v1281
        %v1284 = vrot.slane %v1239, 2
        %v1285 = vsel %vm1130, %v1284, %v1283
        %v1286 = vrot.slane %v1243, 1
        %v1287 = vsel %vm1132, %v1286, %v1285
        %v1290 = vadd.f32 %v1273, %v1287
        %1291 = vadd.xlane.f32.xlu0 %v1290
        %v1292 = vpop.xlane.xlu0 %1291
        %v1293 = vrcp.pop %v1292
        %v1295 = vrot.slane %v1293, 1
        %v1296 = vrot.slane %v1293, 2
        %v1297 = vrot.slane %v1293, 3
        %v1298 = vrot.slane %v1293, 4
        %v1299 = vrot.slane %v1293, 5
        %v1300 = vrot.slane %v1293, 6
        %v1301 = vrot.slane %v1293, 7
        %v1310 = vmul.f32 %v1213, %v1293
        %v1311 = vmul.f32 %v1215, %v1293
        %v1312 = vmul.f32 %v1217, %v1295
        %v1313 = vmul.f32 %v1219, %v1295
        %v1314 = vmul.f32 %v1221, %v1296
        %v1315 = vmul.f32 %v1223, %v1296
        %v1316 = vmul.f32 %v1225, %v1297
        %v1317 = vmul.f32 %v1227, %v1297
        %v1318 = vmul.f32 %v1229, %v1298
        %v1319 = vmul.f32 %v1231, %v1298
        %v1320 = vmul.f32 %v1233, %v1299
        %v1321 = vmul.f32 %v1235, %v1299
        %v1322 = vmul.f32 %v1237, %v1300
        %v1323 = vmul.f32 %v1239, %v1300
        %v1324 = vmul.f32 %v1241, %v1301
        %v1325 = vmul.f32 %v1243, %v1301
        %v1326 = vlaneseq
        %v1327 = vshrl.u32 %v1326, 7
        %v1328 = vsub.s32 0, %v1327
        %v1329 = vrot.slane %v1310, %v1328
        %v1330 = vlaneseq
        %v1331 = vshrl.u32 %v1330, 7
        %v1332 = vsub.s32 0, %v1331
        %v1333 = vrot.slane %v1311, %v1332
        %v1334 = vlaneseq
        %v1335 = vshrl.u32 %v1334, 7
        %v1336 = vsub.s32 0, %v1335
        %v1337 = vrot.slane %v1312, %v1336
        %v1338 = vlaneseq
        %v1339 = vshrl.u32 %v1338, 7
        %v1340 = vsub.s32 0, %v1339
        %v1341 = vrot.slane %v1313, %v1340
        %v1342 = vlaneseq
        %v1343 = vshrl.u32 %v1342, 7
        %v1344 = vsub.s32 0, %v1343
        %v1345 = vrot.slane %v1314, %v1344
        %v1346 = vlaneseq
        %v1347 = vshrl.u32 %v1346, 7
        %v1348 = vsub.s32 0, %v1347
        %v1349 = vrot.slane %v1315, %v1348
        %v1350 = vlaneseq
        %v1351 = vshrl.u32 %v1350, 7
        %v1352 = vsub.s32 0, %v1351
        %v1353 = vrot.slane %v1316, %v1352
        %v1354 = vlaneseq
        %v1355 = vshrl.u32 %v1354, 7
        %v1356 = vsub.s32 0, %v1355
        %v1357 = vrot.slane %v1317, %v1356
        %v1358 = vlaneseq
        %v1359 = vshrl.u32 %v1358, 7
        %v1360 = vsub.s32 0, %v1359
        %v1361 = vrot.slane %v1318, %v1360
        %v1362 = vlaneseq
        %v1363 = vshrl.u32 %v1362, 7
        %v1364 = vsub.s32 0, %v1363
        %v1365 = vrot.slane %v1319, %v1364
        %v1366 = vlaneseq
        %v1367 = vshrl.u32 %v1366, 7
        %v1368 = vsub.s32 0, %v1367
        %v1369 = vrot.slane %v1320, %v1368
        %v1370 = vlaneseq
        %v1371 = vshrl.u32 %v1370, 7
        %v1372 = vsub.s32 0, %v1371
        %v1373 = vrot.slane %v1321, %v1372
        %v1374 = vlaneseq
        %v1375 = vshrl.u32 %v1374, 7
        %v1376 = vsub.s32 0, %v1375
        %v1377 = vrot.slane %v1322, %v1376
        %v1378 = vlaneseq
        %v1379 = vshrl.u32 %v1378, 7
        %v1380 = vsub.s32 0, %v1379
        %v1381 = vrot.slane %v1323, %v1380
        %v1382 = vlaneseq
        %v1383 = vshrl.u32 %v1382, 7
        %v1384 = vsub.s32 0, %v1383
        %v1385 = vrot.slane %v1324, %v1384
        %v1386 = vlaneseq
        %v1387 = vshrl.u32 %v1386, 7
        %v1388 = vsub.s32 0, %v1387
        %v1389 = vrot.slane %v1325, %v1388
        %v1390 = vmul.f32 %v311, %v1329
        %v1391 = vmul.f32 %v312, %v1333
        %v1392 = vmul.f32 %v313, %v1329
        %v1393 = vmul.f32 %v314, %v1333
        %v1394 = vmul.f32 %v315, %v1329
        %v1395 = vmul.f32 %v316, %v1333
        %v1396 = vmul.f32 %v317, %v1329
        %v1397 = vmul.f32 %v318, %v1333
        %v1398 = vmul.f32 %v319, %v1329
        %v1399 = vmul.f32 %v320, %v1333
        %v1400 = vmul.f32 %v321, %v1329
        %v1401 = vmul.f32 %v322, %v1333
        %v1402 = vmul.f32 %v323, %v1329
        %v1403 = vmul.f32 %v324, %v1333
        %v1404 = vmul.f32 %v325, %v1329
        %v1405 = vmul.f32 %v326, %v1333
        %v1406 = vmul.f32 %v327, %v1337
        %v1407 = vmul.f32 %v328, %v1341
        %v1408 = vmul.f32 %v329, %v1337
        %v1409 = vmul.f32 %v330, %v1341
        %v1410 = vmul.f32 %v331, %v1337
        %v1411 = vmul.f32 %v332, %v1341
        %v1412 = vmul.f32 %v333, %v1337
        %v1413 = vmul.f32 %v334, %v1341
        %v1414 = vmul.f32 %v335, %v1337
        %v1415 = vmul.f32 %v336, %v1341
        %v1416 = vmul.f32 %v337, %v1337
        %v1417 = vmul.f32 %v338, %v1341
        %v1418 = vmul.f32 %v339, %v1337
        %v1419 = vmul.f32 %v340, %v1341
        %v1420 = vmul.f32 %v341, %v1337
        %v1421 = vmul.f32 %v342, %v1341
        %v1422 = vmul.f32 %v343, %v1345
        %v1423 = vmul.f32 %v344, %v1349
        %v1424 = vmul.f32 %v345, %v1345
        %v1425 = vmul.f32 %v346, %v1349
        %v1426 = vmul.f32 %v347, %v1345
        %v1427 = vmul.f32 %v348, %v1349
        %v1428 = vmul.f32 %v349, %v1345
        %v1429 = vmul.f32 %v350, %v1349
        %v1430 = vmul.f32 %v351, %v1345
        %v1431 = vmul.f32 %v352, %v1349
        %v1432 = vmul.f32 %v353, %v1345
        %v1433 = vmul.f32 %v354, %v1349
        %v1434 = vmul.f32 %v355, %v1345
        %v1435 = vmul.f32 %v356, %v1349
        %v1436 = vmul.f32 %v357, %v1345
        %v1437 = vmul.f32 %v358, %v1349
        %v1438 = vmul.f32 %v359, %v1353
        %v1439 = vmul.f32 %v360, %v1357
        %v1440 = vmul.f32 %v361, %v1353
        %v1441 = vmul.f32 %v362, %v1357
        %v1442 = vmul.f32 %v363, %v1353
        %v1443 = vmul.f32 %v364, %v1357
        %v1444 = vmul.f32 %v365, %v1353
        %v1445 = vmul.f32 %v366, %v1357
        %v1446 = vmul.f32 %v367, %v1353
        %v1447 = vmul.f32 %v368, %v1357
        %v1448 = vmul.f32 %v369, %v1353
        %v1449 = vmul.f32 %v370, %v1357
        %v1450 = vmul.f32 %v371, %v1353
        %v1451 = vmul.f32 %v372, %v1357
        %v1452 = vmul.f32 %v373, %v1353
        %v1453 = vmul.f32 %v374, %v1357
        %v1454 = vmul.f32 %v375, %v1361
        %v1455 = vmul.f32 %v376, %v1365
        %v1456 = vmul.f32 %v377, %v1361
        %v1457 = vmul.f32 %v378, %v1365
        %v1458 = vmul.f32 %v379, %v1361
        %v1459 = vmul.f32 %v380, %v1365
        %v1460 = vmul.f32 %v381, %v1361
        %v1461 = vmul.f32 %v382, %v1365
        %v1462 = vmul.f32 %v383, %v1361
        %v1463 = vmul.f32 %v384, %v1365
        %v1464 = vmul.f32 %v385, %v1361
        %v1465 = vmul.f32 %v386, %v1365
        %v1466 = vmul.f32 %v387, %v1361
        %v1467 = vmul.f32 %v388, %v1365
        %v1468 = vmul.f32 %v389, %v1361
        %v1469 = vmul.f32 %v390, %v1365
        %v1470 = vmul.f32 %v391, %v1369
        %v1471 = vmul.f32 %v392, %v1373
        %v1472 = vmul.f32 %v393, %v1369
        %v1473 = vmul.f32 %v394, %v1373
        %v1474 = vmul.f32 %v395, %v1369
        %v1475 = vmul.f32 %v396, %v1373
        %v1476 = vmul.f32 %v397, %v1369
        %v1477 = vmul.f32 %v398, %v1373
        %v1478 = vmul.f32 %v399, %v1369
        %v1479 = vmul.f32 %v400, %v1373
        %v1480 = vmul.f32 %v401, %v1369
        %v1481 = vmul.f32 %v402, %v1373
        %v1482 = vmul.f32 %v403, %v1369
        %v1483 = vmul.f32 %v404, %v1373
        %v1484 = vmul.f32 %v405, %v1369
        %v1485 = vmul.f32 %v406, %v1373
        %v1486 = vmul.f32 %v407, %v1377
        %v1487 = vmul.f32 %v408, %v1381
        %v1488 = vmul.f32 %v409, %v1377
        %v1489 = vmul.f32 %v410, %v1381
        %v1490 = vmul.f32 %v411, %v1377
        %v1491 = vmul.f32 %v412, %v1381
        %v1492 = vmul.f32 %v413, %v1377
        %v1493 = vmul.f32 %v414, %v1381
        %v1494 = vmul.f32 %v415, %v1377
        %v1495 = vmul.f32 %v416, %v1381
        %v1496 = vmul.f32 %v417, %v1377
        %v1497 = vmul.f32 %v418, %v1381
        %v1498 = vmul.f32 %v419, %v1377
        %v1499 = vmul.f32 %v420, %v1381
        %v1500 = vmul.f32 %v421, %v1377
        %v1501 = vmul.f32 %v422, %v1381
        %v1502 = vmul.f32 %v423, %v1385
        %v1503 = vmul.f32 %v424, %v1389
        %v1504 = vmul.f32 %v425, %v1385
        %v1505 = vmul.f32 %v426, %v1389
        %v1506 = vmul.f32 %v427, %v1385
        %v1507 = vmul.f32 %v428, %v1389
        %v1508 = vmul.f32 %v429, %v1385
        %v1509 = vmul.f32 %v430, %v1389
        %v1510 = vmul.f32 %v431, %v1385
        %v1511 = vmul.f32 %v432, %v1389
        %v1512 = vmul.f32 %v433, %v1385
        %v1513 = vmul.f32 %v434, %v1389
        %v1514 = vmul.f32 %v435, %v1385
        %v1515 = vmul.f32 %v436, %v1389
        %v1516 = vmul.f32 %v437, %v1385
        %v1517 = vmul.f32 %v438, %v1389
        %v1518 = vadd.f32 %v1390, %v1391
        %1519 = vadd.xlane.f32.xlu0 %v1518
        %v1520 = vpop.xlane.xlu0 %1519
        %v1521 = vadd.f32 %v1392, %v1393
        %1522 = vadd.xlane.f32.xlu0 %v1521
        %v1523 = vpop.xlane.xlu0 %1522
        %v1524 = vadd.f32 %v1394, %v1395
        %1525 = vadd.xlane.f32.xlu0 %v1524
        %v1526 = vpop.xlane.xlu0 %1525
        %v1527 = vadd.f32 %v1396, %v1397
        %1528 = vadd.xlane.f32.xlu0 %v1527
        %v1529 = vpop.xlane.xlu0 %1528
        %v1530 = vadd.f32 %v1398, %v1399
        %1531 = vadd.xlane.f32.xlu0 %v1530
        %v1532 = vpop.xlane.xlu0 %1531
        %v1533 = vadd.f32 %v1400, %v1401
        %1534 = vadd.xlane.f32.xlu0 %v1533
        %v1535 = vpop.xlane.xlu0 %1534
        %v1536 = vadd.f32 %v1402, %v1403
        %1537 = vadd.xlane.f32.xlu0 %v1536
        %v1538 = vpop.xlane.xlu0 %1537
        %v1539 = vadd.f32 %v1404, %v1405
        %1540 = vadd.xlane.f32.xlu0 %v1539
        %v1541 = vpop.xlane.xlu0 %1540
        %v1542 = vadd.f32 %v1406, %v1407
        %1543 = vadd.xlane.f32.xlu0 %v1542
        %v1544 = vpop.xlane.xlu0 %1543
        %v1545 = vadd.f32 %v1408, %v1409
        %1546 = vadd.xlane.f32.xlu0 %v1545
        %v1547 = vpop.xlane.xlu0 %1546
        %v1548 = vadd.f32 %v1410, %v1411
        %1549 = vadd.xlane.f32.xlu0 %v1548
        %v1550 = vpop.xlane.xlu0 %1549
        %v1551 = vadd.f32 %v1412, %v1413
        %1552 = vadd.xlane.f32.xlu0 %v1551
        %v1553 = vpop.xlane.xlu0 %1552
        %v1554 = vadd.f32 %v1414, %v1415
        %1555 = vadd.xlane.f32.xlu0 %v1554
        %v1556 = vpop.xlane.xlu0 %1555
        %v1557 = vadd.f32 %v1416, %v1417
        %1558 = vadd.xlane.f32.xlu0 %v1557
        %v1559 = vpop.xlane.xlu0 %1558
        %v1560 = vadd.f32 %v1418, %v1419
        %1561 = vadd.xlane.f32.xlu0 %v1560
        %v1562 = vpop.xlane.xlu0 %1561
        %v1563 = vadd.f32 %v1420, %v1421
        %1564 = vadd.xlane.f32.xlu0 %v1563
        %v1565 = vpop.xlane.xlu0 %1564
        %v1566 = vadd.f32 %v1422, %v1423
        %1567 = vadd.xlane.f32.xlu0 %v1566
        %v1568 = vpop.xlane.xlu0 %1567
        %v1569 = vadd.f32 %v1424, %v1425
        %1570 = vadd.xlane.f32.xlu0 %v1569
        %v1571 = vpop.xlane.xlu0 %1570
        %v1572 = vadd.f32 %v1426, %v1427
        %1573 = vadd.xlane.f32.xlu0 %v1572
        %v1574 = vpop.xlane.xlu0 %1573
        %v1575 = vadd.f32 %v1428, %v1429
        %1576 = vadd.xlane.f32.xlu0 %v1575
        %v1577 = vpop.xlane.xlu0 %1576
        %v1578 = vadd.f32 %v1430, %v1431
        %1579 = vadd.xlane.f32.xlu0 %v1578
        %v1580 = vpop.xlane.xlu0 %1579
        %v1581 = vadd.f32 %v1432, %v1433
        %1582 = vadd.xlane.f32.xlu0 %v1581
        %v1583 = vpop.xlane.xlu0 %1582
        %v1584 = vadd.f32 %v1434, %v1435
        %1585 = vadd.xlane.f32.xlu0 %v1584
        %v1586 = vpop.xlane.xlu0 %1585
        %v1587 = vadd.f32 %v1436, %v1437
        %1588 = vadd.xlane.f32.xlu0 %v1587
        %v1589 = vpop.xlane.xlu0 %1588
        %v1590 = vadd.f32 %v1438, %v1439
        %1591 = vadd.xlane.f32.xlu0 %v1590
        %v1592 = vpop.xlane.xlu0 %1591
        %v1593 = vadd.f32 %v1440, %v1441
        %1594 = vadd.xlane.f32.xlu0 %v1593
        %v1595 = vpop.xlane.xlu0 %1594
        %v1596 = vadd.f32 %v1442, %v1443
        %1597 = vadd.xlane.f32.xlu0 %v1596
        %v1598 = vpop.xlane.xlu0 %1597
        %v1599 = vadd.f32 %v1444, %v1445
        %1600 = vadd.xlane.f32.xlu0 %v1599
        %v1601 = vpop.xlane.xlu0 %1600
        %v1602 = vadd.f32 %v1446, %v1447
        %1603 = vadd.xlane.f32.xlu0 %v1602
        %v1604 = vpop.xlane.xlu0 %1603
        %v1605 = vadd.f32 %v1448, %v1449
        %1606 = vadd.xlane.f32.xlu0 %v1605
        %v1607 = vpop.xlane.xlu0 %1606
        %v1608 = vadd.f32 %v1450, %v1451
        %1609 = vadd.xlane.f32.xlu0 %v1608
        %v1610 = vpop.xlane.xlu0 %1609
        %v1611 = vadd.f32 %v1452, %v1453
        %1612 = vadd.xlane.f32.xlu0 %v1611
        %v1613 = vpop.xlane.xlu0 %1612
        %v1614 = vadd.f32 %v1454, %v1455
        %1615 = vadd.xlane.f32.xlu0 %v1614
        %v1616 = vpop.xlane.xlu0 %1615
        %v1617 = vadd.f32 %v1456, %v1457
        %1618 = vadd.xlane.f32.xlu0 %v1617
        %v1619 = vpop.xlane.xlu0 %1618
        %v1620 = vadd.f32 %v1458, %v1459
        %1621 = vadd.xlane.f32.xlu0 %v1620
        %v1622 = vpop.xlane.xlu0 %1621
        %v1623 = vadd.f32 %v1460, %v1461
        %1624 = vadd.xlane.f32.xlu0 %v1623
        %v1625 = vpop.xlane.xlu0 %1624
        %v1626 = vadd.f32 %v1462, %v1463
        %1627 = vadd.xlane.f32.xlu0 %v1626
        %v1628 = vpop.xlane.xlu0 %1627
        %v1629 = vadd.f32 %v1464, %v1465
        %1630 = vadd.xlane.f32.xlu0 %v1629
        %v1631 = vpop.xlane.xlu0 %1630
        %v1632 = vadd.f32 %v1466, %v1467
        %1633 = vadd.xlane.f32.xlu0 %v1632
        %v1634 = vpop.xlane.xlu0 %1633
        %v1635 = vadd.f32 %v1468, %v1469
        %1636 = vadd.xlane.f32.xlu0 %v1635
        %v1637 = vpop.xlane.xlu0 %1636
        %v1638 = vadd.f32 %v1470, %v1471
        %1639 = vadd.xlane.f32.xlu0 %v1638
        %v1640 = vpop.xlane.xlu0 %1639
        %v1641 = vadd.f32 %v1472, %v1473
        %1642 = vadd.xlane.f32.xlu0 %v1641
        %v1643 = vpop.xlane.xlu0 %1642
        %v1644 = vadd.f32 %v1474, %v1475
        %1645 = vadd.xlane.f32.xlu0 %v1644
        %v1646 = vpop.xlane.xlu0 %1645
        %v1647 = vadd.f32 %v1476, %v1477
        %1648 = vadd.xlane.f32.xlu0 %v1647
        %v1649 = vpop.xlane.xlu0 %1648
        %v1650 = vadd.f32 %v1478, %v1479
        %1651 = vadd.xlane.f32.xlu0 %v1650
        %v1652 = vpop.xlane.xlu0 %1651
        %v1653 = vadd.f32 %v1480, %v1481
        %1654 = vadd.xlane.f32.xlu0 %v1653
        %v1655 = vpop.xlane.xlu0 %1654
        %v1656 = vadd.f32 %v1482, %v1483
        %1657 = vadd.xlane.f32.xlu0 %v1656
        %v1658 = vpop.xlane.xlu0 %1657
        %v1659 = vadd.f32 %v1484, %v1485
        %1660 = vadd.xlane.f32.xlu0 %v1659
        %v1661 = vpop.xlane.xlu0 %1660
        %v1662 = vadd.f32 %v1486, %v1487
        %1663 = vadd.xlane.f32.xlu0 %v1662
        %v1664 = vpop.xlane.xlu0 %1663
        %v1665 = vadd.f32 %v1488, %v1489
        %1666 = vadd.xlane.f32.xlu0 %v1665
        %v1667 = vpop.xlane.xlu0 %1666
        %v1668 = vadd.f32 %v1490, %v1491
        %1669 = vadd.xlane.f32.xlu0 %v1668
        %v1670 = vpop.xlane.xlu0 %1669
        %v1671 = vadd.f32 %v1492, %v1493
        %1672 = vadd.xlane.f32.xlu0 %v1671
        %v1673 = vpop.xlane.xlu0 %1672
        %v1674 = vadd.f32 %v1494, %v1495
        %1675 = vadd.xlane.f32.xlu0 %v1674
        %v1676 = vpop.xlane.xlu0 %1675
        %v1677 = vadd.f32 %v1496, %v1497
        %1678 = vadd.xlane.f32.xlu0 %v1677
        %v1679 = vpop.xlane.xlu0 %1678
        %v1680 = vadd.f32 %v1498, %v1499
        %1681 = vadd.xlane.f32.xlu0 %v1680
        %v1682 = vpop.xlane.xlu0 %1681
        %v1683 = vadd.f32 %v1500, %v1501
        %1684 = vadd.xlane.f32.xlu0 %v1683
        %v1685 = vpop.xlane.xlu0 %1684
        %v1686 = vadd.f32 %v1502, %v1503
        %1687 = vadd.xlane.f32.xlu0 %v1686
        %v1688 = vpop.xlane.xlu0 %1687
        %v1689 = vadd.f32 %v1504, %v1505
        %1690 = vadd.xlane.f32.xlu0 %v1689
        %v1691 = vpop.xlane.xlu0 %1690
        %v1692 = vadd.f32 %v1506, %v1507
        %1693 = vadd.xlane.f32.xlu0 %v1692
        %v1694 = vpop.xlane.xlu0 %1693
        %v1695 = vadd.f32 %v1508, %v1509
        %1696 = vadd.xlane.f32.xlu0 %v1695
        %v1697 = vpop.xlane.xlu0 %1696
        %v1698 = vadd.f32 %v1510, %v1511
        %1699 = vadd.xlane.f32.xlu0 %v1698
        %v1700 = vpop.xlane.xlu0 %1699
        %v1701 = vadd.f32 %v1512, %v1513
        %1702 = vadd.xlane.f32.xlu0 %v1701
        %v1703 = vpop.xlane.xlu0 %1702
        %v1704 = vadd.f32 %v1514, %v1515
        %1705 = vadd.xlane.f32.xlu0 %v1704
        %v1706 = vpop.xlane.xlu0 %1705
        %v1707 = vadd.f32 %v1516, %v1517
        %1708 = vadd.xlane.f32.xlu0 %v1707
        %v1709 = vpop.xlane.xlu0 %1708
        %v1774 = vlaneseq
        %v1775 = vand.u32 %v1774, 127
        %v1776 = vlaneseq
        %v1777 = vshrl.u32 %v1776, 7
        %v1778 = vsub.s32 %v1775, %v1777
        %v1779 = vrot.slane %v1520, %v1778
        %v1780 = vadd.s32 %v1775, 4294967288
        %v1781 = vlaneseq
        %v1782 = vshrl.u32 %v1781, 7
        %v1783 = vsub.s32 %v1780, %v1782
        %v1784 = vrot.slane %v1523, %v1783
        %vm1785 = vcmask 130112
        %v1786 = vsel %vm1785, %v1784, %v1779
        %v1787 = vadd.s32 %v1775, 4294967280
        %v1788 = vlaneseq
        %v1789 = vshrl.u32 %v1788, 7
        %v1790 = vsub.s32 %v1787, %v1789
        %v1791 = vrot.slane %v1526, %v1790
        %vm1792 = vcmask 195712
        %v1793 = vsel %vm1792, %v1791, %v1786
        %v1794 = vadd.s32 %v1775, 4294967272
        %v1795 = vlaneseq
        %v1796 = vshrl.u32 %v1795, 7
        %v1797 = vsub.s32 %v1794, %v1796
        %v1798 = vrot.slane %v1529, %v1797
        %vm1799 = vcmask 261312
        %v1800 = vsel %vm1799, %v1798, %v1793
        %v1801 = vadd.s32 %v1775, 4294967264
        %v1802 = vlaneseq
        %v1803 = vshrl.u32 %v1802, 7
        %v1804 = vsub.s32 %v1801, %v1803
        %v1805 = vrot.slane %v1532, %v1804
        %vm1806 = vcmask 326912
        %v1807 = vsel %vm1806, %v1805, %v1800
        %v1808 = vadd.s32 %v1775, 4294967256
        %v1809 = vlaneseq
        %v1810 = vshrl.u32 %v1809, 7
        %v1811 = vsub.s32 %v1808, %v1810
        %v1812 = vrot.slane %v1535, %v1811
        %vm1813 = vcmask 392512
        %v1814 = vsel %vm1813, %v1812, %v1807
        %v1815 = vadd.s32 %v1775, 4294967248
        %v1816 = vlaneseq
        %v1817 = vshrl.u32 %v1816, 7
        %v1818 = vsub.s32 %v1815, %v1817
        %v1819 = vrot.slane %v1538, %v1818
        %vm1820 = vcmask 458112
        %v1821 = vsel %vm1820, %v1819, %v1814
        %v1822 = vadd.s32 %v1775, 4294967240
        %v1823 = vlaneseq
        %v1824 = vshrl.u32 %v1823, 7
        %v1825 = vsub.s32 %v1822, %v1824
        %v1826 = vrot.slane %v1541, %v1825
        %vm1827 = vcmask 523712
        %v1828 = vsel %vm1827, %v1826, %v1821
        %v1829 = vlaneseq
        %v1830 = vshrl.u32 %v1829, 7
        %v1831 = vsub.s32 %v1775, %v1830
        %v1832 = vrot.slane %v1544, %v1831
        %v1833 = vlaneseq
        %v1834 = vshrl.u32 %v1833, 7
        %v1835 = vsub.s32 %v1780, %v1834
        %v1836 = vrot.slane %v1547, %v1835
        %v1837 = vsel %vm1785, %v1836, %v1832
        %v1838 = vlaneseq
        %v1839 = vshrl.u32 %v1838, 7
        %v1840 = vsub.s32 %v1787, %v1839
        %v1841 = vrot.slane %v1550, %v1840
        %v1842 = vsel %vm1792, %v1841, %v1837
        %v1843 = vlaneseq
        %v1844 = vshrl.u32 %v1843, 7
        %v1845 = vsub.s32 %v1794, %v1844
        %v1846 = vrot.slane %v1553, %v1845
        %v1847 = vsel %vm1799, %v1846, %v1842
        %v1848 = vlaneseq
        %v1849 = vshrl.u32 %v1848, 7
        %v1850 = vsub.s32 %v1801, %v1849
        %v1851 = vrot.slane %v1556, %v1850
        %v1852 = vsel %vm1806, %v1851, %v1847
        %v1853 = vlaneseq
        %v1854 = vshrl.u32 %v1853, 7
        %v1855 = vsub.s32 %v1808, %v1854
        %v1856 = vrot.slane %v1559, %v1855
        %v1857 = vsel %vm1813, %v1856, %v1852
        %v1858 = vlaneseq
        %v1859 = vshrl.u32 %v1858, 7
        %v1860 = vsub.s32 %v1815, %v1859
        %v1861 = vrot.slane %v1562, %v1860
        %v1862 = vsel %vm1820, %v1861, %v1857
        %v1863 = vlaneseq
        %v1864 = vshrl.u32 %v1863, 7
        %v1865 = vsub.s32 %v1822, %v1864
        %v1866 = vrot.slane %v1565, %v1865
        %v1867 = vsel %vm1827, %v1866, %v1862
        %v1868 = vlaneseq
        %v1869 = vshrl.u32 %v1868, 7
        %v1870 = vsub.s32 %v1775, %v1869
        %v1871 = vrot.slane %v1568, %v1870
        %v1872 = vlaneseq
        %v1873 = vshrl.u32 %v1872, 7
        %v1874 = vsub.s32 %v1780, %v1873
        %v1875 = vrot.slane %v1571, %v1874
        %v1876 = vsel %vm1785, %v1875, %v1871
        %v1877 = vlaneseq
        %v1878 = vshrl.u32 %v1877, 7
        %v1879 = vsub.s32 %v1787, %v1878
        %v1880 = vrot.slane %v1574, %v1879
        %v1881 = vsel %vm1792, %v1880, %v1876
        %v1882 = vlaneseq
        %v1883 = vshrl.u32 %v1882, 7
        %v1884 = vsub.s32 %v1794, %v1883
        %v1885 = vrot.slane %v1577, %v1884
        %v1886 = vsel %vm1799, %v1885, %v1881
        %v1887 = vlaneseq
        %v1888 = vshrl.u32 %v1887, 7
        %v1889 = vsub.s32 %v1801, %v1888
        %v1890 = vrot.slane %v1580, %v1889
        %v1891 = vsel %vm1806, %v1890, %v1886
        %v1892 = vlaneseq
        %v1893 = vshrl.u32 %v1892, 7
        %v1894 = vsub.s32 %v1808, %v1893
        %v1895 = vrot.slane %v1583, %v1894
        %v1896 = vsel %vm1813, %v1895, %v1891
        %v1897 = vlaneseq
        %v1898 = vshrl.u32 %v1897, 7
        %v1899 = vsub.s32 %v1815, %v1898
        %v1900 = vrot.slane %v1586, %v1899
        %v1901 = vsel %vm1820, %v1900, %v1896
        %v1902 = vlaneseq
        %v1903 = vshrl.u32 %v1902, 7
        %v1904 = vsub.s32 %v1822, %v1903
        %v1905 = vrot.slane %v1589, %v1904
        %v1906 = vsel %vm1827, %v1905, %v1901
        %v1907 = vlaneseq
        %v1908 = vshrl.u32 %v1907, 7
        %v1909 = vsub.s32 %v1775, %v1908
        %v1910 = vrot.slane %v1592, %v1909
        %v1911 = vlaneseq
        %v1912 = vshrl.u32 %v1911, 7
        %v1913 = vsub.s32 %v1780, %v1912
        %v1914 = vrot.slane %v1595, %v1913
        %v1915 = vsel %vm1785, %v1914, %v1910
        %v1916 = vlaneseq
        %v1917 = vshrl.u32 %v1916, 7
        %v1918 = vsub.s32 %v1787, %v1917
        %v1919 = vrot.slane %v1598, %v1918
        %v1920 = vsel %vm1792, %v1919, %v1915
        %v1921 = vlaneseq
        %v1922 = vshrl.u32 %v1921, 7
        %v1923 = vsub.s32 %v1794, %v1922
        %v1924 = vrot.slane %v1601, %v1923
        %v1925 = vsel %vm1799, %v1924, %v1920
        %v1926 = vlaneseq
        %v1927 = vshrl.u32 %v1926, 7
        %v1928 = vsub.s32 %v1801, %v1927
        %v1929 = vrot.slane %v1604, %v1928
        %v1930 = vsel %vm1806, %v1929, %v1925
        %v1931 = vlaneseq
        %v1932 = vshrl.u32 %v1931, 7
        %v1933 = vsub.s32 %v1808, %v1932
        %v1934 = vrot.slane %v1607, %v1933
        %v1935 = vsel %vm1813, %v1934, %v1930
        %v1936 = vlaneseq
        %v1937 = vshrl.u32 %v1936, 7
        %v1938 = vsub.s32 %v1815, %v1937
        %v1939 = vrot.slane %v1610, %v1938
        %v1940 = vsel %vm1820, %v1939, %v1935
        %v1941 = vlaneseq
        %v1942 = vshrl.u32 %v1941, 7
        %v1943 = vsub.s32 %v1822, %v1942
        %v1944 = vrot.slane %v1613, %v1943
        %v1945 = vsel %vm1827, %v1944, %v1940
        %v1946 = vlaneseq
        %v1947 = vshrl.u32 %v1946, 7
        %v1948 = vsub.s32 %v1775, %v1947
        %v1949 = vrot.slane %v1616, %v1948
        %v1950 = vlaneseq
        %v1951 = vshrl.u32 %v1950, 7
        %v1952 = vsub.s32 %v1780, %v1951
        %v1953 = vrot.slane %v1619, %v1952
        %v1954 = vsel %vm1785, %v1953, %v1949
        %v1955 = vlaneseq
        %v1956 = vshrl.u32 %v1955, 7
        %v1957 = vsub.s32 %v1787, %v1956
        %v1958 = vrot.slane %v1622, %v1957
        %v1959 = vsel %vm1792, %v1958, %v1954
        %v1960 = vlaneseq
        %v1961 = vshrl.u32 %v1960, 7
        %v1962 = vsub.s32 %v1794, %v1961
        %v1963 = vrot.slane %v1625, %v1962
        %v1964 = vsel %vm1799, %v1963, %v1959
        %v1965 = vlaneseq
        %v1966 = vshrl.u32 %v1965, 7
        %v1967 = vsub.s32 %v1801, %v1966
        %v1968 = vrot.slane %v1628, %v1967
        %v1969 = vsel %vm1806, %v1968, %v1964
        %v1970 = vlaneseq
        %v1971 = vshrl.u32 %v1970, 7
        %v1972 = vsub.s32 %v1808, %v1971
        %v1973 = vrot.slane %v1631, %v1972
        %v1974 = vsel %vm1813, %v1973, %v1969
        %v1975 = vlaneseq
        %v1976 = vshrl.u32 %v1975, 7
        %v1977 = vsub.s32 %v1815, %v1976
        %v1978 = vrot.slane %v1634, %v1977
        %v1979 = vsel %vm1820, %v1978, %v1974
        %v1980 = vlaneseq
        %v1981 = vshrl.u32 %v1980, 7
        %v1982 = vsub.s32 %v1822, %v1981
        %v1983 = vrot.slane %v1637, %v1982
        %v1984 = vsel %vm1827, %v1983, %v1979
        %v1985 = vlaneseq
        %v1986 = vshrl.u32 %v1985, 7
        %v1987 = vsub.s32 %v1775, %v1986
        %v1988 = vrot.slane %v1640, %v1987
        %v1989 = vlaneseq
        %v1990 = vshrl.u32 %v1989, 7
        %v1991 = vsub.s32 %v1780, %v1990
        %v1992 = vrot.slane %v1643, %v1991
        %v1993 = vsel %vm1785, %v1992, %v1988
        %v1994 = vlaneseq
        %v1995 = vshrl.u32 %v1994, 7
        %v1996 = vsub.s32 %v1787, %v1995
        %v1997 = vrot.slane %v1646, %v1996
        %v1998 = vsel %vm1792, %v1997, %v1993
        %v1999 = vlaneseq
        %v2000 = vshrl.u32 %v1999, 7
        %v2001 = vsub.s32 %v1794, %v2000
        %v2002 = vrot.slane %v1649, %v2001
        %v2003 = vsel %vm1799, %v2002, %v1998
        %v2004 = vlaneseq
        %v2005 = vshrl.u32 %v2004, 7
        %v2006 = vsub.s32 %v1801, %v2005
        %v2007 = vrot.slane %v1652, %v2006
        %v2008 = vsel %vm1806, %v2007, %v2003
        %v2009 = vlaneseq
        %v2010 = vshrl.u32 %v2009, 7
        %v2011 = vsub.s32 %v1808, %v2010
        %v2012 = vrot.slane %v1655, %v2011
        %v2013 = vsel %vm1813, %v2012, %v2008
        %v2014 = vlaneseq
        %v2015 = vshrl.u32 %v2014, 7
        %v2016 = vsub.s32 %v1815, %v2015
        %v2017 = vrot.slane %v1658, %v2016
        %v2018 = vsel %vm1820, %v2017, %v2013
        %v2019 = vlaneseq
        %v2020 = vshrl.u32 %v2019, 7
        %v2021 = vsub.s32 %v1822, %v2020
        %v2022 = vrot.slane %v1661, %v2021
        %v2023 = vsel %vm1827, %v2022, %v2018
        %v2024 = vlaneseq
        %v2025 = vshrl.u32 %v2024, 7
        %v2026 = vsub.s32 %v1775, %v2025
        %v2027 = vrot.slane %v1664, %v2026
        %v2028 = vlaneseq
        %v2029 = vshrl.u32 %v2028, 7
        %v2030 = vsub.s32 %v1780, %v2029
        %v2031 = vrot.slane %v1667, %v2030
        %v2032 = vsel %vm1785, %v2031, %v2027
        %v2033 = vlaneseq
        %v2034 = vshrl.u32 %v2033, 7
        %v2035 = vsub.s32 %v1787, %v2034
        %v2036 = vrot.slane %v1670, %v2035
        %v2037 = vsel %vm1792, %v2036, %v2032
        %v2038 = vlaneseq
        %v2039 = vshrl.u32 %v2038, 7
        %v2040 = vsub.s32 %v1794, %v2039
        %v2041 = vrot.slane %v1673, %v2040
        %v2042 = vsel %vm1799, %v2041, %v2037
        %v2043 = vlaneseq
        %v2044 = vshrl.u32 %v2043, 7
        %v2045 = vsub.s32 %v1801, %v2044
        %v2046 = vrot.slane %v1676, %v2045
        %v2047 = vsel %vm1806, %v2046, %v2042
        %v2048 = vlaneseq
        %v2049 = vshrl.u32 %v2048, 7
        %v2050 = vsub.s32 %v1808, %v2049
        %v2051 = vrot.slane %v1679, %v2050
        %v2052 = vsel %vm1813, %v2051, %v2047
        %v2053 = vlaneseq
        %v2054 = vshrl.u32 %v2053, 7
        %v2055 = vsub.s32 %v1815, %v2054
        %v2056 = vrot.slane %v1682, %v2055
        %v2057 = vsel %vm1820, %v2056, %v2052
        %v2058 = vlaneseq
        %v2059 = vshrl.u32 %v2058, 7
        %v2060 = vsub.s32 %v1822, %v2059
        %v2061 = vrot.slane %v1685, %v2060
        %v2062 = vsel %vm1827, %v2061, %v2057
        %v2063 = vlaneseq
        %v2064 = vshrl.u32 %v2063, 7
        %v2065 = vsub.s32 %v1775, %v2064
        %v2066 = vrot.slane %v1688, %v2065
        %v2067 = vlaneseq
        %v2068 = vshrl.u32 %v2067, 7
        %v2069 = vsub.s32 %v1780, %v2068
        %v2070 = vrot.slane %v1691, %v2069
        %v2071 = vsel %vm1785, %v2070, %v2066
        %v2072 = vlaneseq
        %v2073 = vshrl.u32 %v2072, 7
        %v2074 = vsub.s32 %v1787, %v2073
        %v2075 = vrot.slane %v1694, %v2074
        %v2076 = vsel %vm1792, %v2075, %v2071
        %v2077 = vlaneseq
        %v2078 = vshrl.u32 %v2077, 7
        %v2079 = vsub.s32 %v1794, %v2078
        %v2080 = vrot.slane %v1697, %v2079
        %v2081 = vsel %vm1799, %v2080, %v2076
        %v2082 = vlaneseq
        %v2083 = vshrl.u32 %v2082, 7
        %v2084 = vsub.s32 %v1801, %v2083
        %v2085 = vrot.slane %v1700, %v2084
        %v2086 = vsel %vm1806, %v2085, %v2081
        %v2087 = vlaneseq
        %v2088 = vshrl.u32 %v2087, 7
        %v2089 = vsub.s32 %v1808, %v2088
        %v2090 = vrot.slane %v1703, %v2089
        %v2091 = vsel %vm1813, %v2090, %v2086
        %v2092 = vlaneseq
        %v2093 = vshrl.u32 %v2092, 7
        %v2094 = vsub.s32 %v1815, %v2093
        %v2095 = vrot.slane %v1706, %v2094
        %v2096 = vsel %vm1820, %v2095, %v2091
        %v2097 = vlaneseq
        %v2098 = vshrl.u32 %v2097, 7
        %v2099 = vsub.s32 %v1822, %v2098
        %v2100 = vrot.slane %v1709, %v2099
        %v2101 = vsel %vm1827, %v2100, %v2096
        %v2102 = vsel %vm1120, %v1867, %v1828
        %v2103 = vsel %vm1122, %v1906, %v2102
        %v2104 = vsel %vm1124, %v1945, %v2103
        %v2105 = vsel %vm1126, %v1984, %v2104
        %v2106 = vsel %vm1128, %v2023, %v2105
        %v2107 = vsel %vm1130, %v2062, %v2106
        %v2108 = vsel %vm1132, %v2101, %v2107
        %vm2110 = vcmask 523264
        %2111 = vst.msk [vmem:[%s219] sm:$0xff] %vm2110, %v2108
        %p2112 = scmp.lt.s32.totalorder %s19, 1
        %s2113 = scalar_select %p2112, %s19, 1
        %s2114 = smul.addr %s2113, 2
        %s2115 = smul.addr %s2114, 8
        %s2116 = scalar_lea.vmem %s3, %s2115
        %s2117 = sand.u32 %s126, 1
        %s2118 = scalar_lea.sflag [#allocation3], %s2117
        %s2119 = sand.u32 %s126, 1
        %s2120 = smul.addr %s2119, 8
        %s2121 = scalar_lea.vmem [#allocation2], %s2120
        // Predicated region
        $region33: #{spatial_attn.1} parent=31 // pred_check
          %p2122 = pneg %p110
        $region34: #{spatial_attn.1} parent=31 // pred_check_branch
          %2124 = sbr.rel (%p2122) target = $region36
        $region35: #{spatial_attn.1} parent=31 // pred_region
          _
        $region36: #{spatial_attn.1} parent=31 // pred_fallthru
          _
        // Predicated region
        $region37: #{spatial_attn.1} parent=31 // pred_check
          %p2125 = pneg %p136
        $region38: #{spatial_attn.1} parent=31 // pred_check_branch
          %2127 = sbr.rel (%p2125) target = $region40
        $region39: #{spatial_attn.1} parent=31 // pred_region
          %s2129 = ssub.s32 128, 128
          %2130 = vsyncadd %s2118, %s2129
          %s2131 = smul.addr %s19, 128
          %s2132 = scalar_lea.hbm %s4, %s2131
          %s2134 = sshll.u32 %s2121, 4
          %s2135 = int_to_ptr.vmem [resolvable:$true] %s2134
          %2137 = dma.vmem_to_hbm [thread:$0]  %s2135, 128, %s2132, %s2118
        $region40: #{spatial_attn.1} parent=31 // pred_fallthru
          _
      $region32: #{spatial_attn.1} parent=5 // pred_fallthru
        _
      %p2138 = scmp.le.s32.totalorder 2, %s14
      // Predicated region
      $region41: #{spatial_attn.1} parent=5 // pred_check
        %p2139 = pneg %p2138
      $region42: #{spatial_attn.1} parent=5 // pred_check_branch
        %2141 = sbr.rel (%p2139) target = $region44
      $region43: #{spatial_attn.1} parent=5 // pred_region
        %s2142 = ssub.s32 %s14, 2
        // Predicated region
        $region45: #{spatial_attn.1} parent=43 // pred_check
          %p2143 = pneg %p116
        $region46: #{spatial_attn.1} parent=43 // pred_check_branch
          %2145 = sbr.rel (%p2143) target = $region48
        $region47: #{spatial_attn.1} parent=43 // pred_region
          %p2146 = scmp.lt.s32.totalorder %s20, 1
          %s2147 = scalar_select %p2146, %s20, 1
          %s2148 = smul.addr %s2147, 2
          %s2149 = smul.addr %s2148, 8
          %s2150 = scalar_lea.vmem %s3, %s2149
        $region48: #{spatial_attn.1} parent=43 // pred_fallthru
          _
        // Predicated region
        $region49: #{spatial_attn.1} parent=43 // pred_check
          %p2151 = pneg %p142
        $region50: #{spatial_attn.1} parent=43 // pred_check_branch
          %2153 = sbr.rel (%p2151) target = $region52
        $region51: #{spatial_attn.1} parent=43 // pred_region
          %s2154 = sand.u32 %s127, 1
          %s2155 = scalar_lea.sflag [#allocation3], %s2154
          %s2156 = sand.u32 %s127, 1
          %s2157 = smul.addr %s2156, 8
          %s2158 = scalar_lea.vmem [#allocation2], %s2157
          %2159 = dma.done %s2155, 128
        $region52: #{spatial_attn.1} parent=43 // pred_fallthru
          _
      $region44: #{spatial_attn.1} parent=5 // pred_fallthru
        _
    $region6: #{spatial_attn.1} parent=1 // loop_footer
      %s18 = sadd.s32 1, %s14
    $region7: #{spatial_attn.1} parent=1 // loop_footer_branch
      %13 = sbr.rel target = $region3
    $region8: #{spatial_attn.1} parent=1 // loop_exit
      _
    %2160 = vsyncpa [#allocation3], 1
    %s2161 = scalar_lea.sflag [#allocation3], 1
    %2162 = vsyncpa %s2161, 1

</llo_original>
